<compile_context>
chip_gen: v6e
topology: v6e:2x2x1
jax: 0.10.0
libtpu: 0.0.40
codegen_flags: <defaults>
</compile_context>

<pallas_src>
import functools
from functools import partial

import numpy as np
import jax
import jax.numpy as jnp
from jax import lax
from jax.experimental import pallas as pl
from jax.experimental.pallas import tpu as pltpu

BN_EPS = 1e-5


# ---------------------------------------------------------------------------
# Generation-aware VMEM budgets (safe fallbacks if the query is unavailable)
# ---------------------------------------------------------------------------
def _vmem_budgets():
    cap = None
    try:
        info = pltpu.get_tpu_info()
        cap = int(getattr(info, "vmem_capacity_bytes", 0)) or None
    except Exception:
        cap = None
    if cap is None:
        cap = 64 * 1024 * 1024                     # conservative (v7x-sized) fallback
    limit = min((cap * 3) // 4, 100 * 1024 * 1024)  # scoped-VMEM limit for pallas_call
    fused_budget = limit // 2                       # fused full-M path footprint ceiling
    a_tile_budget = fused_budget // 3               # (tm, K) operand ceiling, tiled path
    return limit, fused_budget, a_tile_budget


VMEM_LIMIT_BYTES, FUSED_VMEM_BUDGET, A_TILE_BUDGET = _vmem_budgets()


# ---------------------------------------------------------------------------
# Pallas kernels
# ---------------------------------------------------------------------------
def _conv_bn_fused_kernel(*refs, relu, add_res, m_total):
    """Full-M block: matmul + two-pass batch-stat BatchNorm + residual + ReLU."""
    if add_res:
        a_ref, b_ref, g_ref, bt_ref, r_ref, o_ref = refs
    else:
        a_ref, b_ref, g_ref, bt_ref, o_ref = refs
        r_ref = None
    y = jnp.dot(a_ref[...], b_ref[...], preferred_element_type=jnp.float32)
    inv_m = 1.0 / m_total
    mu = jnp.sum(y, axis=0, keepdims=True) * inv_m
    d = y - mu
    var = jnp.sum(d * d, axis=0, keepdims=True) * inv_m
    out = d * jax.lax.rsqrt(var + BN_EPS) * g_ref[...] + bt_ref[...]
    if add_res:
        out = out + r_ref[...].astype(jnp.float32)
    if relu:
        out = jnp.maximum(out, 0.0)
    o_ref[...] = out.astype(o_ref.dtype)


def _matmul_stats_kernel(a_ref, b_ref, y_ref, s_ref):
    """M-tiled pass 1 (large inputs only): matmul tile (bf16 writeback) + per-channel
    sum / sum-of-squares accumulated across the M grid axis."""
    @pl.when(pl.program_id(1) == 0)
    def _():
        s_ref[...] = jnp.zeros_like(s_ref)
    y = jnp.dot(a_ref[...], b_ref[...], preferred_element_type=jnp.float32)
    y_ref[...] = y.astype(y_ref.dtype)
    s_ref[0:1, :] += jnp.sum(y, axis=0, keepdims=True)
    s_ref[1:2, :] += jnp.sum(y * y, axis=0, keepdims=True)


def _bn_act_kernel(*refs, relu, add_res, m_total):
    """M-tiled pass 2: normalize with global batch stats + residual + ReLU (streaming)."""
    if add_res:
        y_ref, s_ref, g_ref, bt_ref, r_ref, o_ref = refs
    else:
        y_ref, s_ref, g_ref, bt_ref, o_ref = refs
        r_ref = None
    inv_m = 1.0 / m_total
    st = s_ref[...]
    mu = st[0:1, :] * inv_m
    var = jnp.maximum(st[1:2, :] * inv_m - mu * mu, 0.0)
    y = y_ref[...].astype(jnp.float32)
    out = (y - mu) * jax.lax.rsqrt(var + BN_EPS) * g_ref[...] + bt_ref[...]
    if add_res:
        out = out + r_ref[...].astype(jnp.float32)
    if relu:
        out = jnp.maximum(out, 0.0)
    o_ref[...] = out.astype(o_ref.dtype)


def _head_kernel(f_ref, weff_ref, beff_ref, d_ref, w1b_ref, d2_ref, w1c_ref,
                 w2_ref, b2_ref, o_ref):
    # fc1(cat([cnn.fc(feats), ocr, sd])) with cnn.fc folded into fc1, concat expressed
    # as a split-weight sum of matmuls; then ReLU and fc2.  One fused kernel.
    h = (jnp.dot(f_ref[...], weff_ref[...], preferred_element_type=jnp.float32)
         + jnp.dot(d_ref[...], w1b_ref[...], preferred_element_type=jnp.float32)
         + jnp.dot(d2_ref[...], w1c_ref[...], preferred_element_type=jnp.float32)
         + beff_ref[...])
    h = jnp.maximum(h, 0.0)
    o_ref[...] = jnp.dot(h, w2_ref[...], preferred_element_type=jnp.float32) + b2_ref[...]


# ---------------------------------------------------------------------------
# Tiling helpers
# ---------------------------------------------------------------------------
def _pick_tn(cout):
    # >= 2 channel tiles whenever cout >= 256 (keeps both v7x cores busy, halves the
    # resident weight tile); otherwise the largest lane-dense tile that divides cout.
    if cout % 256 == 0:
        return max(128, cout // 2)
    if cout % 128 == 0:
        return 128
    return cout


def _pick_tm(M, K):
    for tm in (2048, 1024, 512, 256, 128, 64, 32, 16, 8):
        if tm <= M and M % tm == 0 and 2 * tm * K * 2 <= A_TILE_BUDGET:
            return tm
    return None


def _pick_stream_tm(M, tn, add_res, fallback):
    # Pass 2 is memory-bound: pick the biggest tile that fits, independent of pass-1 tm.
    per_row = 2 * tn * (2 + 2 + (2 if add_res else 0))    # double-buffered bf16 blocks
    cap = max(8, FUSED_VMEM_BUDGET // max(per_row, 1))
    for tm in (8192, 4096, 2048, 1024, 512, 256, 128, 64, 32, 16, 8):
        if tm <= M and tm <= cap and M % tm == 0:
            return tm
    return fallback


def _fused_vmem_bytes(M, K, tn, add_res):
    b = 2 * M * K * 2                  # bf16 patches block
    b += 2 * K * tn * 2                # bf16 weight tile
    b += 2 * M * tn * 2                # bf16 output tile
    if add_res:
        b += 2 * M * tn * 2
    b += 2 * M * tn * 4                # f32 matmul result + centered copy
    return b


def _build_patches(x2d, nhw, cin, kh, kw, stride, pad):
    """Channels-last im2col.  x2d: [N*H*W, Cin] -> [N*Ho*Wo, kh*kw*Cin]."""
    N, H, W = nhw
    Ho = (H + 2 * pad - kh) // stride + 1
    Wo = (W + 2 * pad - kw) // stride + 1
    if kh == 1 and kw == 1 and pad == 0:
        if stride == 1:
            return x2d, Ho, Wo                       # 1x1 conv: no im2col at all
        x4 = x2d.reshape(N, H, W, cin)
        return x4[:, ::stride, ::stride, :].reshape(N * Ho * Wo, cin), Ho, Wo
    x4 = x2d.reshape(N, H, W, cin)
    if pad > 0:
        x4 = jnp.pad(x4, ((0, 0), (pad, pad), (pad, pad), (0, 0)))
    slabs = []
    for i in range(kh):
        for j in range(kw):
            slabs.append(x4[:, i:i + stride * (Ho - 1) + 1:stride,
                               j:j + stride * (Wo - 1) + 1:stride, :])
    patches = jnp.concatenate(slabs, axis=-1).reshape(N * Ho * Wo, kh * kw * cin)
    return patches, Ho, Wo


# ---------------------------------------------------------------------------
# Conv + BN (+residual)(+ReLU)   (traced inside the per-block / stem jits)
# ---------------------------------------------------------------------------
def _fused_conv_call(patches, w2d, gamma, beta, residual, tn, add_res, relu):
    M, K = patches.shape
    cout = w2d.shape[1]
    grid_c = cout // tn
    args = [patches, w2d, gamma, beta]
    in_specs = [
        pl.BlockSpec((M, K), lambda j: (0, 0)),       # grid-invariant activation block
        pl.BlockSpec((K, tn), lambda j: (0, j)),
        pl.BlockSpec((1, tn), lambda j: (0, j)),
        pl.BlockSpec((1, tn), lambda j: (0, j)),
    ]
    if add_res:
        args.append(residual)
        in_specs.append(pl.BlockSpec((M, tn), lambda j: (0, j)))
    return pl.pallas_call(
        functools.partial(_conv_bn_fused_kernel, relu=relu, add_res=add_res, m_total=M),
        grid=(grid_c,),
        in_specs=in_specs,
        out_specs=pl.BlockSpec((M, tn), lambda j: (0, j)),
        out_shape=jax.ShapeDtypeStruct((M, cout), jnp.bfloat16),
        compiler_params=pltpu.CompilerParams(
            dimension_semantics=("parallel",),
            vmem_limit_bytes=VMEM_LIMIT_BYTES),
    )(*args)


def _conv_bn_act(x2d, nhw, w2d, kh, kw, gamma, beta, residual, *, stride, pad, relu):
    K, cout = w2d.shape
    cin = K // (kh * kw)
    patches, Ho, Wo = _build_patches(x2d, nhw, cin, kh, kw, stride, pad)
    M = patches.shape[0]
    add_res = residual is not None
    tn = _pick_tn(cout)

    # Fused vs. two-pass decided purely on VMEM footprint (review item).
    if _fused_vmem_bytes(M, K, tn, add_res) <= FUSED_VMEM_BUDGET:
        out = _fused_conv_call(patches, w2d, gamma, beta, residual, tn, add_res, relu)
        return out, Ho, Wo

    # ---------- M-tiled two-pass path (large inputs only; never taken at 32x32) ----------
    m_total = M
    tm = _pick_tm(M, K)
    if tm is None:
        # Non-divisible M: pad with zero rows (zeros contribute nothing to the batch
        # stats since m_total stays at the real M); slice the rows off afterwards.
        pad_rows = (-M) % 512
        if pad_rows:
            patches = jnp.pad(patches, ((0, pad_rows), (0, 0)))
            if add_res:
                residual = jnp.pad(residual, ((0, pad_rows), (0, 0)))
            M = M + pad_rows
        tm = _pick_tm(M, K) or min(512, M)

    grid_c = cout // tn
    y, stats = pl.pallas_call(
        _matmul_stats_kernel,
        grid=(grid_c, M // tm),
        in_specs=[
            pl.BlockSpec((tm, K), lambda c, m: (m, 0)),
            pl.BlockSpec((K, tn), lambda c, m: (0, c)),
        ],
        out_specs=(
            pl.BlockSpec((tm, tn), lambda c, m: (m, c)),
            pl.BlockSpec((2, tn), lambda c, m: (0, c)),   # resident accumulator over m
        ),
        out_shape=(
            jax.ShapeDtypeStruct((M, cout), jnp.bfloat16),  # bf16 intermediate (review)
            jax.ShapeDtypeStruct((2, cout), jnp.float32),
        ),
        compiler_params=pltpu.CompilerParams(
            dimension_semantics=("parallel", "arbitrary"),
            vmem_limit_bytes=VMEM_LIMIT_BYTES),
    )(patches, w2d)

    tm2 = _pick_stream_tm(M, tn, add_res, tm)
    args = [y, stats, gamma, beta]
    in_specs = [
        pl.BlockSpec((tm2, tn), lambda m, c: (m, c)),
        pl.BlockSpec((2, tn), lambda m, c: (0, c)),
        pl.BlockSpec((1, tn), lambda m, c: (0, c)),
        pl.BlockSpec((1, tn), lambda m, c: (0, c)),
    ]
    if add_res:
        args.append(residual)
        in_specs.append(pl.BlockSpec((tm2, tn), lambda m, c: (m, c)))
    out = pl.pallas_call(
        functools.partial(_bn_act_kernel, relu=relu, add_res=add_res, m_total=m_total),
        grid=(M // tm2, grid_c),
        in_specs=in_specs,
        out_specs=pl.BlockSpec((tm2, tn), lambda m, c: (m, c)),
        out_shape=jax.ShapeDtypeStruct((M, cout), jnp.bfloat16),
        compiler_params=pltpu.CompilerParams(
            dimension_semantics=("parallel", "parallel"),
            vmem_limit_bytes=VMEM_LIMIT_BYTES),
    )(*args)
    if M != m_total:
        out = out[:m_total]
    return out, Ho, Wo


# ---------------------------------------------------------------------------
# jit'ed stages: stem(+maxpool), bottleneck block, head
# ---------------------------------------------------------------------------
@jax.jit
def _stem_forward(image, w2d, gamma, beta):
    N, C, H, W = image.shape
    # single entry transpose to channels-last; activations stay [M, C] bf16 afterwards
    x2d = jnp.transpose(image, (0, 2, 3, 1)).reshape(N * H * W, C).astype(jnp.bfloat16)
    out, Ho, Wo = _conv_bn_act(x2d, (N, H, W), w2d, 7, 7, gamma, beta, None,
                               stride=2, pad=3, relu=True)
    # MaxPool 3x3 s2 p1 as one fused reduce_window (no [9,M,C] slab materialization).
    x4 = out.reshape(N, Ho, Wo, out.shape[1])
    neg_inf = jnp.asarray(-jnp.inf, x4.dtype)
    pooled = lax.reduce_window(x4, neg_inf, lax.max,
                               window_dimensions=(1, 3, 3, 1),
                               window_strides=(1, 2, 2, 1),
                               padding=((0, 0), (1, 1), (1, 1), (0, 0)))
    Np, Hp, Wp, Cp = pooled.shape
    return pooled.reshape(Np * Hp * Wp, Cp)


@partial(jax.jit, static_argnames=("nhw", "stride", "has_ds"))
def _bottleneck_block(x2d, p, *, nhw, stride, has_ds):
    N, H, W = nhw
    out, Ho, Wo = _conv_bn_act(x2d, nhw, p["w1"], 1, 1, p["g1"], p["b1"], None,
                               stride=1, pad=0, relu=True)
    out, Ho, Wo = _conv_bn_act(out, (N, Ho, Wo), p["w2"], 3, 3, p["g2"], p["b2"], None,
                               stride=stride, pad=1, relu=True)
    if has_ds:
        identity, _, _ = _conv_bn_act(x2d, nhw, p["wd"], 1, 1, p["gd"], p["bd"], None,
                                      stride=stride, pad=0, relu=False)
    else:
        identity = x2d
    # out = relu(bn3(conv3(out)) + identity), fused in one kernel
    out, _, _ = _conv_bn_act(out, (N, Ho, Wo), p["w3"], 1, 1, p["g3"], p["b3"], identity,
                             stride=1, pad=0, relu=True)
    return out


@partial(jax.jit, static_argnames=("nhw",))
def _head_forward(x2d, w_eff, b_eff, w1b, w1c, w2, b2, *, nhw):
    N, H, W = nhw
    C = x2d.shape[1]
    # adaptive avg-pool (1,1) + flatten -> [N, 2048]
    feats = jnp.mean(x2d.reshape(N, H * W, C).astype(jnp.float32), axis=1)
    # TODO(synk): ocr() uses the keras_ocr text-recognition pipeline (host library) -- no
    # Pallas equivalent; emit its all-zero "no keyword matched" output [N, 21].
    data = jnp.zeros((N, 21), jnp.float32)
    # TODO(synk): sd() uses OpenCV contour/shape analysis -- no Pallas equivalent; emit
    # its all-zero "no large contour" 4-bit encoding [N, 4].
    data2 = jnp.zeros((N, 4), jnp.float32)
    args = (feats, w_eff, b_eff, data, w1b, data2, w1c, w2, b2)
    in_specs = [pl.BlockSpec(a.shape, lambda i: (0, 0)) for a in args]
    return pl.pallas_call(
        _head_kernel,
        grid=(1,),
        in_specs=in_specs,
        out_specs=pl.BlockSpec((N, 18), lambda i: (0, 0)),
        out_shape=jax.ShapeDtypeStruct((N, 18), jnp.float32),
        compiler_params=pltpu.CompilerParams(vmem_limit_bytes=VMEM_LIMIT_BYTES),
    )(*args)


# ---------------------------------------------------------------------------
# Deterministic parameter construction (ResNet-152 shapes + the two FC heads).
# Weights are stored pre-transposed / pre-cast (matmul layout, bf16) so the per-forward
# path launches no layout ops.
# ---------------------------------------------------------------------------
def _prep_conv_weight(w_oihw):
    cout, cin, kh, kw = w_oihw.shape
    if kh == 1 and kw == 1:
        return jnp.asarray(w_oihw.reshape(cout, cin).T, jnp.bfloat16)
    # rows ordered (i, j, c) to match the channels-last im2col
    return jnp.asarray(w_oihw.transpose(2, 3, 1, 0).reshape(kh * kw * cin, cout),
                       jnp.bfloat16)


def make_resnet152_params(key):
    # TODO(synk): pretrained=True weights cannot be loaded here; deterministic He-style init.
    idx = [0]

    def nkey():
        idx[0] += 1
        return jax.random.fold_in(key, idx[0])

    def conv_w(cout, cin, kh, kw):
        std = float(np.sqrt(2.0 / (cin * kh * kw)))
        w = std * jax.random.normal(nkey(), (cout, cin, kh, kw), jnp.float32)
        return _prep_conv_weight(w)

    def bn_params(c):
        return jnp.ones((1, c), jnp.float32), jnp.zeros((1, c), jnp.float32)

    params = {"stem_w2d": conv_w(64, 3, 7, 7)}
    params["stem_g"], params["stem_b"] = bn_params(64)

    layers_cfg = [(64, 3, 1), (128, 8, 2), (256, 36, 2), (512, 3, 2)]  # ResNet-152
    inplanes = 64
    layers = []
    for planes, nblocks, stride in layers_cfg:
        blocks = []
        for b in range(nblocks):
            s = stride if b == 0 else 1
            p = {}
            p["w1"] = conv_w(planes, inplanes, 1, 1)
            p["g1"], p["b1"] = bn_params(planes)
            p["w2"] = conv_w(planes, planes, 3, 3)
            p["g2"], p["b2"] = bn_params(planes)
            p["w3"] = conv_w(planes * 4, planes, 1, 1)
            p["g3"], p["b3"] = bn_params(planes * 4)
            if b == 0 and (s != 1 or inplanes != planes * 4):
                p["wd"] = conv_w(planes * 4, inplanes, 1, 1)
                p["gd"], p["bd"] = bn_params(planes * 4)
            else:
                p["wd"] = None
            blocks.append({"stride": s, "params": p})
            inplanes = planes * 4
        layers.append(blocks)
    params["layers"] = layers
    return params


def make_head_params(key):
    def linear(k, fin, fout):
        lim = float(1.0 / np.sqrt(fin))
        kw_, kb = jax.random.split(k)
        w = jax.random.uniform(kw_, (fin, fout), jnp.float32, minval=-lim, maxval=lim)
        b = jax.random.uniform(kb, (1, fout), jnp.float32, minval=-lim, maxval=lim)
        return w, b

    k1, k2, k3 = jax.random.split(key, 3)
    wfc, bfc = linear(k1, 2048, 29)        # cnn.fc : 2048 -> 29
    w1, b1 = linear(k2, 29 + 21 + 4, 36)   # fc1    : 54   -> 36
    w2, b2 = linear(k3, 36, 18)            # fc2    : 36   -> 18
    w1a, w1b, w1c = w1[:29], w1[29:50], w1[50:54]
    # fold cnn.fc into fc1 once (hoisted out of the per-forward path)
    w_eff = jnp.dot(wfc, w1a)              # [2048, 36]
    b_eff = jnp.dot(bfc, w1a) + b1         # [1, 36]
    return {"w_eff": w_eff, "b_eff": b_eff, "w1b": w1b, "w1c": w1c, "w2": w2, "b2": b2}


# ---------------------------------------------------------------------------
# Forward pass
# ---------------------------------------------------------------------------
def resnet152_forward(rp, image):
    N, _, H, W = image.shape
    x2d = _stem_forward(image, rp["stem_w2d"], rp["stem_g"], rp["stem_b"])
    H1 = (H + 6 - 7) // 2 + 1
    W1 = (W + 6 - 7) // 2 + 1
    nhw = (N, (H1 - 1) // 2 + 1, (W1 - 1) // 2 + 1)   # after maxpool 3x3 s2 p1
    for blocks in rp["layers"]:
        for blk in blocks:
            s = blk["stride"]
            has_ds = blk["params"]["wd"] is not None
            x2d = _bottleneck_block(x2d, blk["params"], nhw=nhw, stride=s, has_ds=has_ds)
            Np, Hc, Wc = nhw
            nhw = (Np, (Hc - 1) // s + 1, (Wc - 1) // s + 1)
    return x2d, nhw


def my_model_forward(params, image):
    # NOTE: BatchNorm uses training-mode batch statistics (source is a training script).
    x2d, nhw = resnet152_forward(params["resnet"], image)
    p = params["head"]
    return _head_forward(x2d, p["w_eff"], p["b_eff"], p["w1b"], p["w1c"],
                         p["w2"], p["b2"], nhw=nhw)


# ---------------------------------------------------------------------------
if __name__ == "__main__":
    key = jax.random.PRNGKey(0)
    k_img, k_res, k_head = jax.random.split(key, 3)
    # NCHW image, 3 channels (ResNet stem requires 3), small spatial size.
    image = jax.random.normal(k_img, (2, 3, 32, 32), jnp.float32)
    params = {"resnet": make_resnet152_params(k_res), "head": make_head_params(k_head)}

    out = my_model_forward(params, image)
    out = jax.block_until_ready(out)
    assert out.shape == (2, 18)
    assert bool(jnp.all(jnp.isfinite(out)))
    print("KERNEL_OK")
</pallas_src>

<mosaic_0001>
module attributes {stable_mosaic.version = 11 : i64} {
  func.func @_conv_bn_fused_kernel(%arg0: i32, %arg1: memref<512x147xbf16, #tpu.memory_space<vmem>>, %arg2: memref<147x64xbf16, #tpu.memory_space<vmem>>, %arg3: memref<1x64xf32, #tpu.memory_space<vmem>>, %arg4: memref<1x64xf32, #tpu.memory_space<vmem>>, %arg5: memref<512x64xbf16, #tpu.memory_space<vmem>>) attributes {dimension_semantics = [#tpu.dimension_semantics<parallel>], iteration_bounds = array<i64: 1>, scalar_prefetch = 0 : i64, scratch_operands = 0 : i64, tpu.core_type = #tpu.core_type<tc>, window_params = [{pipeline_mode = #tpu.pipeline_mode<synchronous>, transform_indices = @transform_0, window_bounds = array<i64: 512, 147>}, {transform_indices = @transform_1, window_bounds = array<i64: 147, 64>}, {transform_indices = @transform_2, window_bounds = array<i64: 1, 64>}, {transform_indices = @transform_3, window_bounds = array<i64: 1, 64>}, {transform_indices = @transform_4, window_bounds = array<i64: 512, 64>}]} {
    %c0 = arith.constant 0 : index
    %c0_0 = arith.constant 0 : index
    %0 = vector.load %arg1[%c0, %c0_0] : memref<512x147xbf16, #tpu.memory_space<vmem>>, vector<512x147xbf16>
    %c0_1 = arith.constant 0 : index
    %c0_2 = arith.constant 0 : index
    %1 = vector.load %arg2[%c0_1, %c0_2] : memref<147x64xbf16, #tpu.memory_space<vmem>>, vector<147x64xbf16>
    %cst = arith.constant dense<0.000000e+00> : vector<512x64xf32>
    %2 = tpu.matmul %0, %1, %cst {dimension_numbers = #tpu.dot_dimension_numbers<[1], [0], [0], [1], [0, 0, 1, 1], [], []>} : vector<512x147xbf16>, vector<147x64xbf16>, vector<512x64xf32> -> vector<512x64xf32>
    %cst_3 = arith.constant dense<0.000000e+00> : vector<64xf32>
    %3 = vector.multi_reduction <add>, %2, %cst_3 [0] : vector<512x64xf32> to vector<64xf32>
    %4 = vector.shape_cast %3 : vector<64xf32> to vector<1x64xf32>
    %cst_4 = arith.constant 0.001953125 : f32
    %5 = vector.broadcast %cst_4 : f32 to vector<1x64xf32>
    %6 = arith.mulf %4, %5 : vector<1x64xf32>
    %7 = vector.broadcast %6 : vector<1x64xf32> to vector<512x64xf32>
    %8 = arith.subf %2, %7 : vector<512x64xf32>
    %9 = arith.mulf %8, %8 : vector<512x64xf32>
    %cst_5 = arith.constant dense<0.000000e+00> : vector<64xf32>
    %10 = vector.multi_reduction <add>, %9, %cst_5 [0] : vector<512x64xf32> to vector<64xf32>
    %11 = vector.shape_cast %10 : vector<64xf32> to vector<1x64xf32>
    %cst_6 = arith.constant 0.001953125 : f32
    %12 = vector.broadcast %cst_6 : f32 to vector<1x64xf32>
    %13 = arith.mulf %11, %12 : vector<1x64xf32>
    %cst_7 = arith.constant 9.99999974E-6 : f32
    %14 = vector.broadcast %cst_7 : f32 to vector<1x64xf32>
    %15 = arith.addf %13, %14 : vector<1x64xf32>
    %16 = math.rsqrt %15 : vector<1x64xf32>
    %17 = vector.broadcast %16 : vector<1x64xf32> to vector<512x64xf32>
    %18 = arith.mulf %8, %17 : vector<512x64xf32>
    %c0_8 = arith.constant 0 : index
    %c0_9 = arith.constant 0 : index
    %19 = vector.load %arg3[%c0_8, %c0_9] : memref<1x64xf32, #tpu.memory_space<vmem>>, vector<1x64xf32>
    %20 = vector.broadcast %19 : vector<1x64xf32> to vector<512x64xf32>
    %21 = arith.mulf %18, %20 : vector<512x64xf32>
    %c0_10 = arith.constant 0 : index
    %c0_11 = arith.constant 0 : index
    %22 = vector.load %arg4[%c0_10, %c0_11] : memref<1x64xf32, #tpu.memory_space<vmem>>, vector<1x64xf32>
    %23 = vector.broadcast %22 : vector<1x64xf32> to vector<512x64xf32>
    %24 = arith.addf %21, %23 : vector<512x64xf32>
    %cst_12 = arith.constant 0.000000e+00 : f32
    %25 = vector.broadcast %cst_12 : f32 to vector<512x64xf32>
    %26 = arith.maximumf %24, %25 : vector<512x64xf32>
    %27 = arith.truncf %26 : vector<512x64xf32> to vector<512x64xbf16>
    %c0_13 = arith.constant 0 : index
    %c0_14 = arith.constant 0 : index
    %28 = vector.load %arg5[%c0_13, %c0_14] : memref<512x64xbf16, #tpu.memory_space<vmem>>, vector<512x64xbf16>
    tpu.vector_store %arg5[%c0_13, %c0_14], %27 {strides = array<i32>} : memref<512x64xbf16, #tpu.memory_space<vmem>>, vector<512x64xbf16>,
    return
  }
  func.func @transform_0(%arg0: i32) -> (i32, i32) {
    %c0_i32 = arith.constant 0 : i32
    %c0_i32_0 = arith.constant 0 : i32
    %c0_i32_1 = arith.constant 0 : i32
    return %c0_i32, %c0_i32_0 : i32, i32
  }
  func.func @transform_1(%arg0: i32) -> (i32, i32) {
    %c0_i32 = arith.constant 0 : i32
    %c0_i32_0 = arith.constant 0 : i32
    return %c0_i32, %arg0 : i32, i32
  }
  func.func @transform_2(%arg0: i32) -> (i32, i32) {
    %c0_i32 = arith.constant 0 : i32
    %c0_i32_0 = arith.constant 0 : i32
    return %c0_i32, %arg0 : i32, i32
  }
  func.func @transform_3(%arg0: i32) -> (i32, i32) {
    %c0_i32 = arith.constant 0 : i32
    %c0_i32_0 = arith.constant 0 : i32
    return %c0_i32, %arg0 : i32, i32
  }
  func.func @transform_4(%arg0: i32) -> (i32, i32) {
    %c0_i32 = arith.constant 0 : i32
    %c0_i32_0 = arith.constant 0 : i32
    return %c0_i32, %arg0 : i32, i32
  }
}

</mosaic_0001>

<llo_original>
// kernel: _stem_forward.1
$region0: #{_stem_forward.1}
  #allocation0 [shape = 'u32[]', space=smem, size = 0x4, offset = 0x4, fixed_abs, tag = 'smem constant byte address 0x4 - core index']
  #allocation1 [shape = 'u32[144,128]{1,0:T(1,128)}', space=vmem, size = 0x12000, scoped, tag = 'internal scratch']
  %s0 = inlined_call_operand.vmem [shape: bf16[512,147], index: 0, kind: input, shape index: {}]
  %s1 = inlined_call_operand.vmem [shape: bf16[147,64], index: 1, kind: input, shape index: {}]
  %s2 = inlined_call_operand.vmem [shape: f32[1,64], index: 2, kind: input, shape index: {}]
  %s3 = inlined_call_operand.vmem [shape: f32[1,64], index: 3, kind: input, shape index: {}]
  %s4 = inlined_call_operand.vmem [shape: bf16[512,64], index: 4, kind: output, shape index: {}]
  %s5 = sld [smem:[#allocation0]]
  $region26: #{_stem_forward.1} parent=0
    _
  %s7 = ssub.s32 1, %s5
  %s8 = scalar_select 0, %s7, %s5
  // Predicated region
  $region2: #{_stem_forward.1} parent=0 // pred_check
    _
  $region3: #{_stem_forward.1} parent=0 // pred_check_branch
    %10 = sbr.rel (0) target = $region5
  $region4: #{_stem_forward.1} parent=0 // pred_region
    _
  $region5: #{_stem_forward.1} parent=0 // pred_fallthru
    _
  // Predicated region
  $region6: #{_stem_forward.1} parent=0 // pred_check
    _
  $region7: #{_stem_forward.1} parent=0 // pred_check_branch
    %12 = sbr.rel (0) target = $region9
  $region8: #{_stem_forward.1} parent=0 // pred_region
    _
  $region9: #{_stem_forward.1} parent=0 // pred_fallthru
    _
  // Predicated region
  $region10: #{_stem_forward.1} parent=0 // pred_check
    _
  $region11: #{_stem_forward.1} parent=0 // pred_check_branch
    %14 = sbr.rel (0) target = $region13
  $region12: #{_stem_forward.1} parent=0 // pred_region
    _
  $region13: #{_stem_forward.1} parent=0 // pred_fallthru
    _
  // Predicated region
  $region14: #{_stem_forward.1} parent=0 // pred_check
    _
  $region15: #{_stem_forward.1} parent=0 // pred_check_branch
    %16 = sbr.rel (0) target = $region17
  $region16: #{_stem_forward.1} parent=0 // pred_region
    _
  $region17: #{_stem_forward.1} parent=0 // pred_fallthru
    _
  %v18 = vld [vmem:[%s0] sm:$0xff]
  %v19 = vld [vmem:[%s0 + $0x8] sm:$0xff]
  %v20 = vld [vmem:[%s0 + $0x10] sm:$0xff]
  %v21 = vld [vmem:[%s0 + $0x18] sm:$0xff]
  %v22 = vld [vmem:[%s0 + $0x20] sm:$0xff]
  %v23 = vld [vmem:[%s0 + $0x28] sm:$0xff]
  %v24 = vld [vmem:[%s0 + $0x30] sm:$0xff]
  %v25 = vld [vmem:[%s0 + $0x38] sm:$0xff]
  %v26 = vld [vmem:[%s0 + $0x40] sm:$0xff]
  %v27 = vld [vmem:[%s0 + $0x48] sm:$0xff]
  %v28 = vld [vmem:[%s0 + $0x50] sm:$0xff]
  %v29 = vld [vmem:[%s0 + $0x58] sm:$0xff]
  %v30 = vld [vmem:[%s0 + $0x60] sm:$0xff]
  %v31 = vld [vmem:[%s0 + $0x68] sm:$0xff]
  %v32 = vld [vmem:[%s0 + $0x70] sm:$0xff]
  %v33 = vld [vmem:[%s0 + $0x78] sm:$0xff]
  %v34 = vld [vmem:[%s0 + $0x80] sm:$0xff]
  %v35 = vld [vmem:[%s0 + $0x88] sm:$0xff]
  %v36 = vld [vmem:[%s0 + $0x90] sm:$0xff]
  %v37 = vld [vmem:[%s0 + $0x98] sm:$0xff]
  %v38 = vld [vmem:[%s0 + $0xa0] sm:$0xff]
  %v39 = vld [vmem:[%s0 + $0xa8] sm:$0xff]
  %v40 = vld [vmem:[%s0 + $0xb0] sm:$0xff]
  %v41 = vld [vmem:[%s0 + $0xb8] sm:$0xff]
  %v42 = vld [vmem:[%s0 + $0xc0] sm:$0xff]
  %v43 = vld [vmem:[%s0 + $0xc8] sm:$0xff]
  %v44 = vld [vmem:[%s0 + $0xd0] sm:$0xff]
  %v45 = vld [vmem:[%s0 + $0xd8] sm:$0xff]
  %v46 = vld [vmem:[%s0 + $0xe0] sm:$0xff]
  %v47 = vld [vmem:[%s0 + $0xe8] sm:$0xff]
  %v48 = vld [vmem:[%s0 + $0xf0] sm:$0xff]
  %v49 = vld [vmem:[%s0 + $0xf8] sm:$0xff]
  %v50 = vld [vmem:[%s0 + $0x100] sm:$0xff]
  %v51 = vld [vmem:[%s0 + $0x108] sm:$0xff]
  %v52 = vld [vmem:[%s0 + $0x110] sm:$0xff]
  %v53 = vld [vmem:[%s0 + $0x118] sm:$0xff]
  %v54 = vld [vmem:[%s0 + $0x120] sm:$0xff]
  %v55 = vld [vmem:[%s0 + $0x128] sm:$0xff]
  %v56 = vld [vmem:[%s0 + $0x130] sm:$0xff]
  %v57 = vld [vmem:[%s0 + $0x138] sm:$0xff]
  %v58 = vld [vmem:[%s0 + $0x140] sm:$0xff]
  %v59 = vld [vmem:[%s0 + $0x148] sm:$0xff]
  %v60 = vld [vmem:[%s0 + $0x150] sm:$0xff]
  %v61 = vld [vmem:[%s0 + $0x158] sm:$0xff]
  %v62 = vld [vmem:[%s0 + $0x160] sm:$0xff]
  %v63 = vld [vmem:[%s0 + $0x168] sm:$0xff]
  %v64 = vld [vmem:[%s0 + $0x170] sm:$0xff]
  %v65 = vld [vmem:[%s0 + $0x178] sm:$0xff]
  %v66 = vld [vmem:[%s0 + $0x180] sm:$0xff]
  %v67 = vld [vmem:[%s0 + $0x188] sm:$0xff]
  %v68 = vld [vmem:[%s0 + $0x190] sm:$0xff]
  %v69 = vld [vmem:[%s0 + $0x198] sm:$0xff]
  %v70 = vld [vmem:[%s0 + $0x1a0] sm:$0xff]
  %v71 = vld [vmem:[%s0 + $0x1a8] sm:$0xff]
  %v72 = vld [vmem:[%s0 + $0x1b0] sm:$0xff]
  %v73 = vld [vmem:[%s0 + $0x1b8] sm:$0xff]
  %v74 = vld [vmem:[%s0 + $0x1c0] sm:$0xff]
  %v75 = vld [vmem:[%s0 + $0x1c8] sm:$0xff]
  %v76 = vld [vmem:[%s0 + $0x1d0] sm:$0xff]
  %v77 = vld [vmem:[%s0 + $0x1d8] sm:$0xff]
  %v78 = vld [vmem:[%s0 + $0x1e0] sm:$0xff]
  %v79 = vld [vmem:[%s0 + $0x1e8] sm:$0xff]
  %v80 = vld [vmem:[%s0 + $0x1f0] sm:$0xff]
  %v81 = vld [vmem:[%s0 + $0x1f8] sm:$0xff]
  %v82 = vld [vmem:[%s1] sm:$0xf]
  %v83 = vld [vmem:[%s1 + $0x4] sm:$0xf]
  %v84 = vld [vmem:[%s1 + $0x8] sm:$0xf]
  %v85 = vld [vmem:[%s1 + $0xc] sm:$0xf]
  %v86 = vld [vmem:[%s1 + $0x10] sm:$0xf]
  %v87 = vld [vmem:[%s1 + $0x14] sm:$0xf]
  %v88 = vld [vmem:[%s1 + $0x18] sm:$0xf]
  %v89 = vld [vmem:[%s1 + $0x1c] sm:$0xf]
  %v90 = vld [vmem:[%s1 + $0x20] sm:$0xf]
  %v91 = vld [vmem:[%s1 + $0x24] sm:$0xf]
  %v92 = vld [vmem:[%s1 + $0x28] sm:$0xf]
  %v93 = vld [vmem:[%s1 + $0x2c] sm:$0xf]
  %v94 = vld [vmem:[%s1 + $0x30] sm:$0xf]
  %v95 = vld [vmem:[%s1 + $0x34] sm:$0xf]
  %v96 = vld [vmem:[%s1 + $0x38] sm:$0xf]
  %v97 = vld [vmem:[%s1 + $0x3c] sm:$0xf]
  %v98 = vld [vmem:[%s1 + $0x40] sm:$0xf]
  %v99 = vld [vmem:[%s1 + $0x44] sm:$0xf]
  %v100 = vld [vmem:[%s1 + $0x48] sm:$0x3]
  %v165 = vunpack.c.l.b16 %v18
  %v166 = vunpack.c.h.b16 %v18
  %v167 = vunpack.c.l.b16 %v19
  %v168 = vunpack.c.h.b16 %v19
  %v169 = vunpack.c.l.b16 %v20
  %v170 = vunpack.c.h.b16 %v20
  %v171 = vunpack.c.l.b16 %v21
  %v172 = vunpack.c.h.b16 %v21
  %v173 = vunpack.c.l.b16 %v22
  %v174 = vunpack.c.h.b16 %v22
  %v175 = vunpack.c.l.b16 %v23
  %v176 = vunpack.c.h.b16 %v23
  %v177 = vunpack.c.l.b16 %v24
  %v178 = vunpack.c.h.b16 %v24
  %v179 = vunpack.c.l.b16 %v25
  %v180 = vunpack.c.h.b16 %v25
  %v181 = vunpack.c.l.b16 %v26
  %v182 = vunpack.c.h.b16 %v26
  %v183 = vunpack.c.l.b16 %v27
  %v184 = vunpack.c.h.b16 %v27
  %v185 = vunpack.c.l.b16 %v28
  %v186 = vunpack.c.h.b16 %v28
  %v187 = vunpack.c.l.b16 %v29
  %v188 = vunpack.c.h.b16 %v29
  %v189 = vunpack.c.l.b16 %v30
  %v190 = vunpack.c.h.b16 %v30
  %v191 = vunpack.c.l.b16 %v31
  %v192 = vunpack.c.h.b16 %v31
  %v193 = vunpack.c.l.b16 %v32
  %v194 = vunpack.c.h.b16 %v32
  %v195 = vunpack.c.l.b16 %v33
  %v196 = vunpack.c.h.b16 %v33
  %v197 = vunpack.c.l.b16 %v34
  %v198 = vunpack.c.h.b16 %v34
  %v199 = vunpack.c.l.b16 %v35
  %v200 = vunpack.c.h.b16 %v35
  %v201 = vunpack.c.l.b16 %v36
  %v202 = vunpack.c.h.b16 %v36
  %v203 = vunpack.c.l.b16 %v37
  %v204 = vunpack.c.h.b16 %v37
  %v205 = vunpack.c.l.b16 %v38
  %v206 = vunpack.c.h.b16 %v38
  %v207 = vunpack.c.l.b16 %v39
  %v208 = vunpack.c.h.b16 %v39
  %v209 = vunpack.c.l.b16 %v40
  %v210 = vunpack.c.h.b16 %v40
  %v211 = vunpack.c.l.b16 %v41
  %v212 = vunpack.c.h.b16 %v41
  %v213 = vunpack.c.l.b16 %v42
  %v214 = vunpack.c.h.b16 %v42
  %v215 = vunpack.c.l.b16 %v43
  %v216 = vunpack.c.h.b16 %v43
  %v217 = vunpack.c.l.b16 %v44
  %v218 = vunpack.c.h.b16 %v44
  %v219 = vunpack.c.l.b16 %v45
  %v220 = vunpack.c.h.b16 %v45
  %v221 = vunpack.c.l.b16 %v46
  %v222 = vunpack.c.h.b16 %v46
  %v223 = vunpack.c.l.b16 %v47
  %v224 = vunpack.c.h.b16 %v47
  %v225 = vunpack.c.l.b16 %v48
  %v226 = vunpack.c.h.b16 %v48
  %v227 = vunpack.c.l.b16 %v49
  %v228 = vunpack.c.h.b16 %v49
  %v229 = vunpack.c.l.b16 %v50
  %v230 = vunpack.c.h.b16 %v50
  %v231 = vunpack.c.l.b16 %v51
  %v232 = vunpack.c.h.b16 %v51
  %v233 = vunpack.c.l.b16 %v52
  %v234 = vunpack.c.h.b16 %v52
  %v235 = vunpack.c.l.b16 %v53
  %v236 = vunpack.c.h.b16 %v53
  %v237 = vunpack.c.l.b16 %v54
  %v238 = vunpack.c.h.b16 %v54
  %v239 = vunpack.c.l.b16 %v55
  %v240 = vunpack.c.h.b16 %v55
  %v241 = vunpack.c.l.b16 %v56
  %v242 = vunpack.c.h.b16 %v56
  %v243 = vunpack.c.l.b16 %v57
  %v244 = vunpack.c.h.b16 %v57
  %v245 = vunpack.c.l.b16 %v58
  %v246 = vunpack.c.h.b16 %v58
  %v247 = vunpack.c.l.b16 %v59
  %v248 = vunpack.c.h.b16 %v59
  %v249 = vunpack.c.l.b16 %v60
  %v250 = vunpack.c.h.b16 %v60
  %v251 = vunpack.c.l.b16 %v61
  %v252 = vunpack.c.h.b16 %v61
  %v253 = vunpack.c.l.b16 %v62
  %v254 = vunpack.c.h.b16 %v62
  %v255 = vunpack.c.l.b16 %v63
  %v256 = vunpack.c.h.b16 %v63
  %v257 = vunpack.c.l.b16 %v64
  %v258 = vunpack.c.h.b16 %v64
  %v259 = vunpack.c.l.b16 %v65
  %v260 = vunpack.c.h.b16 %v65
  %v261 = vunpack.c.l.b16 %v66
  %v262 = vunpack.c.h.b16 %v66
  %v263 = vunpack.c.l.b16 %v67
  %v264 = vunpack.c.h.b16 %v67
  %v265 = vunpack.c.l.b16 %v68
  %v266 = vunpack.c.h.b16 %v68
  %v267 = vunpack.c.l.b16 %v69
  %v268 = vunpack.c.h.b16 %v69
  %v269 = vunpack.c.l.b16 %v70
  %v270 = vunpack.c.h.b16 %v70
  %v271 = vunpack.c.l.b16 %v71
  %v272 = vunpack.c.h.b16 %v71
  %v273 = vunpack.c.l.b16 %v72
  %v274 = vunpack.c.h.b16 %v72
  %v275 = vunpack.c.l.b16 %v73
  %v276 = vunpack.c.h.b16 %v73
  %v277 = vunpack.c.l.b16 %v74
  %v278 = vunpack.c.h.b16 %v74
  %v279 = vunpack.c.l.b16 %v75
  %v280 = vunpack.c.h.b16 %v75
  %v281 = vunpack.c.l.b16 %v76
  %v282 = vunpack.c.h.b16 %v76
  %v283 = vunpack.c.l.b16 %v77
  %v284 = vunpack.c.h.b16 %v77
  %v285 = vunpack.c.l.b16 %v78
  %v286 = vunpack.c.h.b16 %v78
  %v287 = vunpack.c.l.b16 %v79
  %v288 = vunpack.c.h.b16 %v79
  %v289 = vunpack.c.l.b16 %v80
  %v290 = vunpack.c.h.b16 %v80
  %v291 = vunpack.c.l.b16 %v81
  %v292 = vunpack.c.h.b16 %v81
  %v293 = vpack.c.b16 %v167, %v165
  %v294 = vpack.c.b16 %v168, %v166
  %v295 = vpack.c.b16 %v171, %v169
  %v296 = vpack.c.b16 %v172, %v170
  %v297 = vpack.c.b16 %v175, %v173
  %v298 = vpack.c.b16 %v176, %v174
  %v299 = vpack.c.b16 %v179, %v177
  %v300 = vpack.c.b16 %v180, %v178
  %v301 = vpack.c.b16 %v183, %v181
  %v302 = vpack.c.b16 %v184, %v182
  %v303 = vpack.c.b16 %v187, %v185
  %v304 = vpack.c.b16 %v188, %v186
  %v305 = vpack.c.b16 %v191, %v189
  %v306 = vpack.c.b16 %v192, %v190
  %v307 = vpack.c.b16 %v195, %v193
  %v308 = vpack.c.b16 %v196, %v194
  %v309 = vpack.c.b16 %v199, %v197
  %v310 = vpack.c.b16 %v200, %v198
  %v311 = vpack.c.b16 %v203, %v201
  %v312 = vpack.c.b16 %v204, %v202
  %v313 = vpack.c.b16 %v207, %v205
  %v314 = vpack.c.b16 %v208, %v206
  %v315 = vpack.c.b16 %v211, %v209
  %v316 = vpack.c.b16 %v212, %v210
  %v317 = vpack.c.b16 %v215, %v213
  %v318 = vpack.c.b16 %v216, %v214
  %v319 = vpack.c.b16 %v219, %v217
  %v320 = vpack.c.b16 %v220, %v218
  %v321 = vpack.c.b16 %v223, %v221
  %v322 = vpack.c.b16 %v224, %v222
  %v323 = vpack.c.b16 %v227, %v225
  %v324 = vpack.c.b16 %v228, %v226
  %v325 = vpack.c.b16 %v231, %v229
  %v326 = vpack.c.b16 %v232, %v230
  %v327 = vpack.c.b16 %v235, %v233
  %v328 = vpack.c.b16 %v236, %v234
  %v329 = vpack.c.b16 %v239, %v237
  %v330 = vpack.c.b16 %v240, %v238
  %v331 = vpack.c.b16 %v243, %v241
  %v332 = vpack.c.b16 %v244, %v242
  %v333 = vpack.c.b16 %v247, %v245
  %v334 = vpack.c.b16 %v248, %v246
  %v335 = vpack.c.b16 %v251, %v249
  %v336 = vpack.c.b16 %v252, %v250
  %v337 = vpack.c.b16 %v255, %v253
  %v338 = vpack.c.b16 %v256, %v254
  %v339 = vpack.c.b16 %v259, %v257
  %v340 = vpack.c.b16 %v260, %v258
  %v341 = vpack.c.b16 %v263, %v261
  %v342 = vpack.c.b16 %v264, %v262
  %v343 = vpack.c.b16 %v267, %v265
  %v344 = vpack.c.b16 %v268, %v266
  %v345 = vpack.c.b16 %v271, %v269
  %v346 = vpack.c.b16 %v272, %v270
  %v347 = vpack.c.b16 %v275, %v273
  %v348 = vpack.c.b16 %v276, %v274
  %v349 = vpack.c.b16 %v279, %v277
  %v350 = vpack.c.b16 %v280, %v278
  %v351 = vpack.c.b16 %v283, %v281
  %v352 = vpack.c.b16 %v284, %v282
  %v353 = vpack.c.b16 %v287, %v285
  %v354 = vpack.c.b16 %v288, %v286
  %v355 = vpack.c.b16 %v291, %v289
  %v356 = vpack.c.b16 %v292, %v290
  %v408 = vunpack.c.l.b16 %v82
  %v409 = vunpack.c.l.b16 %v83
  %v410 = vunpack.c.l.b16 %v84
  %v411 = vunpack.c.l.b16 %v85
  %v412 = vunpack.c.l.b16 %v86
  %v413 = vunpack.c.l.b16 %v87
  %v414 = vunpack.c.l.b16 %v88
  %v415 = vunpack.c.l.b16 %v89
  %v416 = vunpack.c.l.b16 %v90
  %v417 = vunpack.c.l.b16 %v91
  %v418 = vunpack.c.l.b16 %v92
  %v419 = vunpack.c.l.b16 %v93
  %v420 = vunpack.c.l.b16 %v94
  %v421 = vunpack.c.l.b16 %v95
  %v422 = vunpack.c.l.b16 %v96
  %v423 = vunpack.c.l.b16 %v97
  %v424 = vunpack.c.l.b16 %v98
  %v425 = vunpack.c.l.b16 %v99
  %v426 = vunpack.c.l.b16 %v100
  %v427 = vpack.c.b16 %v409, %v408
  %v428 = vpack.c.b16 %v411, %v410
  %v429 = vpack.c.b16 %v413, %v412
  %v430 = vpack.c.b16 %v415, %v414
  %v431 = vpack.c.b16 %v417, %v416
  %v432 = vpack.c.b16 %v419, %v418
  %v433 = vpack.c.b16 %v421, %v420
  %v434 = vpack.c.b16 %v423, %v422
  %v435 = vpack.c.b16 %v425, %v424
  %v436 = vpack.c.b16 %v426, %v426
  %vm446 = vcmask 154624
  %v448 = vsel %vm446, %v294, 0
  %v451 = vsel %vm446, %v296, 0
  %v454 = vsel %vm446, %v298, 0
  %v457 = vsel %vm446, %v300, 0
  %v460 = vsel %vm446, %v302, 0
  %v463 = vsel %vm446, %v304, 0
  %v466 = vsel %vm446, %v306, 0
  %v469 = vsel %vm446, %v308, 0
  %v472 = vsel %vm446, %v310, 0
  %v475 = vsel %vm446, %v312, 0
  %v478 = vsel %vm446, %v314, 0
  %v481 = vsel %vm446, %v316, 0
  %v484 = vsel %vm446, %v318, 0
  %v487 = vsel %vm446, %v320, 0
  %v490 = vsel %vm446, %v322, 0
  %v493 = vsel %vm446, %v324, 0
  %v496 = vsel %vm446, %v326, 0
  %v499 = vsel %vm446, %v328, 0
  %v502 = vsel %vm446, %v330, 0
  %v505 = vsel %vm446, %v332, 0
  %v508 = vsel %vm446, %v334, 0
  %v511 = vsel %vm446, %v336, 0
  %v514 = vsel %vm446, %v338, 0
  %v517 = vsel %vm446, %v340, 0
  %v520 = vsel %vm446, %v342, 0
  %v523 = vsel %vm446, %v344, 0
  %v526 = vsel %vm446, %v346, 0
  %v529 = vsel %vm446, %v348, 0
  %v532 = vsel %vm446, %v350, 0
  %v535 = vsel %vm446, %v352, 0
  %v538 = vsel %vm446, %v354, 0
  %v541 = vsel %vm446, %v356, 0
  %vm543 = vcmask 1040384
  %vm544 = vcmask 1041408
  %v545 = vsel %vm543, 4294967295, 65535
  %v546 = vsel %vm544, %v545, 0
  %v548 = vand.u32 %v436, %v546
  %550 = vmatprep.subr.bf16.mxu0 0
  %551 = vmatpush1.bf16.msra.mxu0 %v434
  %552 = vmatprep.subr.bf16.mxu0 0
  %553 = vmatpush1.bf16.msra.mxu0 %v433
  %554 = vmatprep.subr.bf16.mxu0 0
  %555 = vmatpush1.bf16.msra.mxu0 %v432
  %556 = vmatprep.subr.bf16.mxu0 0
  %557 = vmatpush1.bf16.msra.mxu0 %v431
  %558 = vmatprep.subr.bf16.mxu0 0
  %559 = vmatpush1.bf16.msra.mxu0 %v430
  %560 = vmatprep.subr.bf16.mxu0 0
  %561 = vmatpush1.bf16.msra.mxu0 %v429
  %562 = vmatprep.subr.bf16.mxu0 0
  %563 = vmatpush1.bf16.msra.mxu0 %v428
  %564 = vmatprep.subr.bf16.mxu0 0
  %565 = vmatpush1.bf16.msra.mxu0 %v427
  %566 = vmatprep.subr.bf16.mxu0 0
  %567 = vmatpush2.bf16.msra.mxu0 0
  %568 = vmatprep.subr.bf16.mxu0 0
  %569 = vmatpush2.bf16.msra.mxu0 0
  %570 = vmatprep.subr.bf16.mxu0 0
  %571 = vmatpush2.bf16.msra.mxu0 0
  %572 = vmatprep.subr.bf16.mxu0 0
  %573 = vmatpush2.bf16.msra.mxu0 0
  %574 = vmatprep.subr.bf16.mxu0 0
  %575 = vmatpush2.bf16.msra.mxu0 0
  %576 = vmatprep.subr.bf16.mxu0 0
  %577 = vmatpush2.bf16.msra.mxu0 0
  %578 = vmatprep.subr.bf16.mxu0 0
  %579 = vmatpush2.bf16.msra.mxu0 %v548
  %580 = vmatprep.subr.bf16.mxu0 0
  %581 = vmatpush2.bf16.msra.mxu0 %v435
  %582 = vmatprep.mubr.bf16.mxu0 %v448
  %583 = vmatmul.mubr.bf16.gmra.mxu0 %v293
  %v584 = vpop.f32.mrf.mxu0
  %v585 = vadd.f32 0.0, %v584
  %v586 = vpop.f32.mrf.mxu0
  %v587 = vpop.f32.mrf.mxu0
  %v588 = vadd.f32 0.0, %v587
  %v589 = vpop.f32.mrf.mxu0
  %590 = vmatprep.mubr.bf16.mxu0 %v451
  %591 = vmatmul.mubr.bf16.gmra.mxu0 %v295
  %v592 = vpop.f32.mrf.mxu0
  %v593 = vadd.f32 0.0, %v592
  %v594 = vpop.f32.mrf.mxu0
  %v595 = vpop.f32.mrf.mxu0
  %v596 = vadd.f32 0.0, %v595
  %v597 = vpop.f32.mrf.mxu0
  %598 = vmatprep.mubr.bf16.mxu0 %v454
  %599 = vmatmul.mubr.bf16.gmra.mxu0 %v297
  %v600 = vpop.f32.mrf.mxu0
  %v601 = vadd.f32 0.0, %v600
  %v602 = vpop.f32.mrf.mxu0
  %v603 = vpop.f32.mrf.mxu0
  %v604 = vadd.f32 0.0, %v603
  %v605 = vpop.f32.mrf.mxu0
  %606 = vmatprep.mubr.bf16.mxu0 %v457
  %607 = vmatmul.mubr.bf16.gmra.mxu0 %v299
  %v608 = vpop.f32.mrf.mxu0
  %v609 = vadd.f32 0.0, %v608
  %v610 = vpop.f32.mrf.mxu0
  %v611 = vpop.f32.mrf.mxu0
  %v612 = vadd.f32 0.0, %v611
  %v613 = vpop.f32.mrf.mxu0
  %614 = vmatprep.mubr.bf16.mxu0 %v460
  %615 = vmatmul.mubr.bf16.gmra.mxu0 %v301
  %v616 = vpop.f32.mrf.mxu0
  %v617 = vadd.f32 0.0, %v616
  %v618 = vpop.f32.mrf.mxu0
  %v619 = vpop.f32.mrf.mxu0
  %v620 = vadd.f32 0.0, %v619
  %v621 = vpop.f32.mrf.mxu0
  %622 = vmatprep.mubr.bf16.mxu0 %v463
  %623 = vmatmul.mubr.bf16.gmra.mxu0 %v303
  %v624 = vpop.f32.mrf.mxu0
  %v625 = vadd.f32 0.0, %v624
  %v626 = vpop.f32.mrf.mxu0
  %v627 = vpop.f32.mrf.mxu0
  %v628 = vadd.f32 0.0, %v627
  %v629 = vpop.f32.mrf.mxu0
  %630 = vmatprep.mubr.bf16.mxu0 %v466
  %631 = vmatmul.mubr.bf16.gmra.mxu0 %v305
  %v632 = vpop.f32.mrf.mxu0
  %v633 = vadd.f32 0.0, %v632
  %v634 = vpop.f32.mrf.mxu0
  %v635 = vpop.f32.mrf.mxu0
  %v636 = vadd.f32 0.0, %v635
  %v637 = vpop.f32.mrf.mxu0
  %638 = vmatprep.mubr.bf16.mxu0 %v469
  %639 = vmatmul.mubr.bf16.gmra.mxu0 %v307
  %v640 = vpop.f32.mrf.mxu0
  %v641 = vadd.f32 0.0, %v640
  %v642 = vpop.f32.mrf.mxu0
  %v643 = vpop.f32.mrf.mxu0
  %v644 = vadd.f32 0.0, %v643
  %v645 = vpop.f32.mrf.mxu0
  %646 = vmatprep.mubr.bf16.mxu0 %v472
  %647 = vmatmul.mubr.bf16.gmra.mxu0 %v309
  %v648 = vpop.f32.mrf.mxu0
  %v649 = vadd.f32 0.0, %v648
  %v650 = vpop.f32.mrf.mxu0
  %v651 = vpop.f32.mrf.mxu0
  %v652 = vadd.f32 0.0, %v651
  %v653 = vpop.f32.mrf.mxu0
  %654 = vmatprep.mubr.bf16.mxu0 %v475
  %655 = vmatmul.mubr.bf16.gmra.mxu0 %v311
  %v656 = vpop.f32.mrf.mxu0
  %v657 = vadd.f32 0.0, %v656
  %v658 = vpop.f32.mrf.mxu0
  %v659 = vpop.f32.mrf.mxu0
  %v660 = vadd.f32 0.0, %v659
  %v661 = vpop.f32.mrf.mxu0
  %662 = vmatprep.mubr.bf16.mxu0 %v478
  %663 = vmatmul.mubr.bf16.gmra.mxu0 %v313
  %v664 = vpop.f32.mrf.mxu0
  %v665 = vadd.f32 0.0, %v664
  %v666 = vpop.f32.mrf.mxu0
  %v667 = vpop.f32.mrf.mxu0
  %v668 = vadd.f32 0.0, %v667
  %v669 = vpop.f32.mrf.mxu0
  %670 = vmatprep.mubr.bf16.mxu0 %v481
  %671 = vmatmul.mubr.bf16.gmra.mxu0 %v315
  %v672 = vpop.f32.mrf.mxu0
  %v673 = vadd.f32 0.0, %v672
  %v674 = vpop.f32.mrf.mxu0
  %v675 = vpop.f32.mrf.mxu0
  %v676 = vadd.f32 0.0, %v675
  %v677 = vpop.f32.mrf.mxu0
  %678 = vmatprep.mubr.bf16.mxu0 %v484
  %679 = vmatmul.mubr.bf16.gmra.mxu0 %v317
  %v680 = vpop.f32.mrf.mxu0
  %v681 = vadd.f32 0.0, %v680
  %v682 = vpop.f32.mrf.mxu0
  %v683 = vpop.f32.mrf.mxu0
  %v684 = vadd.f32 0.0, %v683
  %v685 = vpop.f32.mrf.mxu0
  %686 = vmatprep.mubr.bf16.mxu0 %v487
  %687 = vmatmul.mubr.bf16.gmra.mxu0 %v319
  %v688 = vpop.f32.mrf.mxu0
  %v689 = vadd.f32 0.0, %v688
  %v690 = vpop.f32.mrf.mxu0
  %v691 = vpop.f32.mrf.mxu0
  %v692 = vadd.f32 0.0, %v691
  %v693 = vpop.f32.mrf.mxu0
  %694 = vmatprep.mubr.bf16.mxu0 %v490
  %695 = vmatmul.mubr.bf16.gmra.mxu0 %v321
  %v696 = vpop.f32.mrf.mxu0
  %v697 = vadd.f32 0.0, %v696
  %v698 = vpop.f32.mrf.mxu0
  %v699 = vpop.f32.mrf.mxu0
  %v700 = vadd.f32 0.0, %v699
  %v701 = vpop.f32.mrf.mxu0
  %702 = vmatprep.mubr.bf16.mxu0 %v493
  %703 = vmatmul.mubr.bf16.gmra.mxu0 %v323
  %v704 = vpop.f32.mrf.mxu0
  %v705 = vadd.f32 0.0, %v704
  %v706 = vpop.f32.mrf.mxu0
  %v707 = vpop.f32.mrf.mxu0
  %v708 = vadd.f32 0.0, %v707
  %v709 = vpop.f32.mrf.mxu0
  %710 = vmatprep.mubr.bf16.mxu0 %v496
  %711 = vmatmul.mubr.bf16.gmra.mxu0 %v325
  %v712 = vpop.f32.mrf.mxu0
  %v713 = vadd.f32 0.0, %v712
  %v714 = vpop.f32.mrf.mxu0
  %v715 = vpop.f32.mrf.mxu0
  %v716 = vadd.f32 0.0, %v715
  %v717 = vpop.f32.mrf.mxu0
  %718 = vmatprep.mubr.bf16.mxu0 %v499
  %719 = vmatmul.mubr.bf16.gmra.mxu0 %v327
  %v720 = vpop.f32.mrf.mxu0
  %v721 = vadd.f32 0.0, %v720
  %v722 = vpop.f32.mrf.mxu0
  %v723 = vpop.f32.mrf.mxu0
  %v724 = vadd.f32 0.0, %v723
  %v725 = vpop.f32.mrf.mxu0
  %726 = vmatprep.mubr.bf16.mxu0 %v502
  %727 = vmatmul.mubr.bf16.gmra.mxu0 %v329
  %v728 = vpop.f32.mrf.mxu0
  %v729 = vadd.f32 0.0, %v728
  %v730 = vpop.f32.mrf.mxu0
  %v731 = vpop.f32.mrf.mxu0
  %v732 = vadd.f32 0.0, %v731
  %v733 = vpop.f32.mrf.mxu0
  %734 = vmatprep.mubr.bf16.mxu0 %v505
  %735 = vmatmul.mubr.bf16.gmra.mxu0 %v331
  %v736 = vpop.f32.mrf.mxu0
  %v737 = vadd.f32 0.0, %v736
  %v738 = vpop.f32.mrf.mxu0
  %v739 = vpop.f32.mrf.mxu0
  %v740 = vadd.f32 0.0, %v739
  %v741 = vpop.f32.mrf.mxu0
  %742 = vmatprep.mubr.bf16.mxu0 %v508
  %743 = vmatmul.mubr.bf16.gmra.mxu0 %v333
  %v744 = vpop.f32.mrf.mxu0
  %v745 = vadd.f32 0.0, %v744
  %v746 = vpop.f32.mrf.mxu0
  %v747 = vpop.f32.mrf.mxu0
  %v748 = vadd.f32 0.0, %v747
  %v749 = vpop.f32.mrf.mxu0
  %750 = vmatprep.mubr.bf16.mxu0 %v511
  %751 = vmatmul.mubr.bf16.gmra.mxu0 %v335
  %v752 = vpop.f32.mrf.mxu0
  %v753 = vadd.f32 0.0, %v752
  %v754 = vpop.f32.mrf.mxu0
  %v755 = vpop.f32.mrf.mxu0
  %v756 = vadd.f32 0.0, %v755
  %v757 = vpop.f32.mrf.mxu0
  %758 = vmatprep.mubr.bf16.mxu0 %v514
  %759 = vmatmul.mubr.bf16.gmra.mxu0 %v337
  %v760 = vpop.f32.mrf.mxu0
  %v761 = vadd.f32 0.0, %v760
  %v762 = vpop.f32.mrf.mxu0
  %v763 = vpop.f32.mrf.mxu0
  %v764 = vadd.f32 0.0, %v763
  %v765 = vpop.f32.mrf.mxu0
  %766 = vmatprep.mubr.bf16.mxu0 %v517
  %767 = vmatmul.mubr.bf16.gmra.mxu0 %v339
  %v768 = vpop.f32.mrf.mxu0
  %v769 = vadd.f32 0.0, %v768
  %v770 = vpop.f32.mrf.mxu0
  %v771 = vpop.f32.mrf.mxu0
  %v772 = vadd.f32 0.0, %v771
  %v773 = vpop.f32.mrf.mxu0
  %774 = vmatprep.mubr.bf16.mxu0 %v520
  %775 = vmatmul.mubr.bf16.gmra.mxu0 %v341
  %v776 = vpop.f32.mrf.mxu0
  %v777 = vadd.f32 0.0, %v776
  %v778 = vpop.f32.mrf.mxu0
  %v779 = vpop.f32.mrf.mxu0
  %v780 = vadd.f32 0.0, %v779
  %v781 = vpop.f32.mrf.mxu0
  %782 = vmatprep.mubr.bf16.mxu0 %v523
  %783 = vmatmul.mubr.bf16.gmra.mxu0 %v343
  %v784 = vpop.f32.mrf.mxu0
  %v785 = vadd.f32 0.0, %v784
  %v786 = vpop.f32.mrf.mxu0
  %v787 = vpop.f32.mrf.mxu0
  %v788 = vadd.f32 0.0, %v787
  %v789 = vpop.f32.mrf.mxu0
  %790 = vmatprep.mubr.bf16.mxu0 %v526
  %791 = vmatmul.mubr.bf16.gmra.mxu0 %v345
  %v792 = vpop.f32.mrf.mxu0
  %v793 = vadd.f32 0.0, %v792
  %v794 = vpop.f32.mrf.mxu0
  %v795 = vpop.f32.mrf.mxu0
  %v796 = vadd.f32 0.0, %v795
  %v797 = vpop.f32.mrf.mxu0
  %798 = vmatprep.mubr.bf16.mxu0 %v529
  %799 = vmatmul.mubr.bf16.gmra.mxu0 %v347
  %v800 = vpop.f32.mrf.mxu0
  %v801 = vadd.f32 0.0, %v800
  %v802 = vpop.f32.mrf.mxu0
  %v803 = vpop.f32.mrf.mxu0
  %v804 = vadd.f32 0.0, %v803
  %v805 = vpop.f32.mrf.mxu0
  %806 = vmatprep.mubr.bf16.mxu0 %v532
  %807 = vmatmul.mubr.bf16.gmra.mxu0 %v349
  %v808 = vpop.f32.mrf.mxu0
  %v809 = vadd.f32 0.0, %v808
  %v810 = vpop.f32.mrf.mxu0
  %v811 = vpop.f32.mrf.mxu0
  %v812 = vadd.f32 0.0, %v811
  %v813 = vpop.f32.mrf.mxu0
  %814 = vmatprep.mubr.bf16.mxu0 %v535
  %815 = vmatmul.mubr.bf16.gmra.mxu0 %v351
  %v816 = vpop.f32.mrf.mxu0
  %v817 = vadd.f32 0.0, %v816
  %v818 = vpop.f32.mrf.mxu0
  %v819 = vpop.f32.mrf.mxu0
  %v820 = vadd.f32 0.0, %v819
  %v821 = vpop.f32.mrf.mxu0
  %822 = vmatprep.mubr.bf16.mxu0 %v538
  %823 = vmatmul.mubr.bf16.gmra.mxu0 %v353
  %v824 = vpop.f32.mrf.mxu0
  %v825 = vadd.f32 0.0, %v824
  %v826 = vpop.f32.mrf.mxu0
  %v827 = vpop.f32.mrf.mxu0
  %v828 = vadd.f32 0.0, %v827
  %v829 = vpop.f32.mrf.mxu0
  %830 = vmatprep.mubr.bf16.mxu0 %v541
  %831 = vmatmul.mubr.bf16.gmra.mxu0 %v355
  %v832 = vpop.f32.mrf.mxu0
  %v833 = vadd.f32 0.0, %v832
  %v834 = vpop.f32.mrf.mxu0
  %v835 = vpop.f32.mrf.mxu0
  %v836 = vadd.f32 0.0, %v835
  %v837 = vpop.f32.mrf.mxu0
  %838 = vdwg.mxu0
  %vm839 = vcmask 523264
  %v840 = vsel %vm839, %v585, 0.0
  %v841 = vsel %vm839, %v588, 0.0
  %v842 = vadd.f32 %v840, %v841
  %v843 = vsel %vm839, %v593, 0.0
  %v844 = vadd.f32 %v842, %v843
  %v845 = vsel %vm839, %v596, 0.0
  %v846 = vadd.f32 %v844, %v845
  %v847 = vsel %vm839, %v601, 0.0
  %v848 = vadd.f32 %v846, %v847
  %v849 = vsel %vm839, %v604, 0.0
  %v850 = vadd.f32 %v848, %v849
  %v851 = vsel %vm839, %v609, 0.0
  %v852 = vadd.f32 %v850, %v851
  %v853 = vsel %vm839, %v612, 0.0
  %v854 = vadd.f32 %v852, %v853
  %v855 = vsel %vm839, %v617, 0.0
  %v856 = vadd.f32 %v854, %v855
  %v857 = vsel %vm839, %v620, 0.0
  %v858 = vadd.f32 %v856, %v857
  %v859 = vsel %vm839, %v625, 0.0
  %v860 = vadd.f32 %v858, %v859
  %v861 = vsel %vm839, %v628, 0.0
  %v862 = vadd.f32 %v860, %v861
  %v863 = vsel %vm839, %v633, 0.0
  %v864 = vadd.f32 %v862, %v863
  %v865 = vsel %vm839, %v636, 0.0
  %v866 = vadd.f32 %v864, %v865
  %v867 = vsel %vm839, %v641, 0.0
  %v868 = vadd.f32 %v866, %v867
  %v869 = vsel %vm839, %v644, 0.0
  %v870 = vadd.f32 %v868, %v869
  %v871 = vsel %vm839, %v649, 0.0
  %v872 = vadd.f32 %v870, %v871
  %v873 = vsel %vm839, %v652, 0.0
  %v874 = vadd.f32 %v872, %v873
  %v875 = vsel %vm839, %v657, 0.0
  %v876 = vadd.f32 %v874, %v875
  %v877 = vsel %vm839, %v660, 0.0
  %v878 = vadd.f32 %v876, %v877
  %v879 = vsel %vm839, %v665, 0.0
  %v880 = vadd.f32 %v878, %v879
  %v881 = vsel %vm839, %v668, 0.0
  %v882 = vadd.f32 %v880, %v881
  %v883 = vsel %vm839, %v673, 0.0
  %v884 = vadd.f32 %v882, %v883
  %v885 = vsel %vm839, %v676, 0.0
  %v886 = vadd.f32 %v884, %v885
  %v887 = vsel %vm839, %v681, 0.0
  %v888 = vadd.f32 %v886, %v887
  %v889 = vsel %vm839, %v684, 0.0
  %v890 = vadd.f32 %v888, %v889
  %v891 = vsel %vm839, %v689, 0.0
  %v892 = vadd.f32 %v890, %v891
  %v893 = vsel %vm839, %v692, 0.0
  %v894 = vadd.f32 %v892, %v893
  %v895 = vsel %vm839, %v697, 0.0
  %v896 = vadd.f32 %v894, %v895
  %v897 = vsel %vm839, %v700, 0.0
  %v898 = vadd.f32 %v896, %v897
  %v899 = vsel %vm839, %v705, 0.0
  %v900 = vadd.f32 %v898, %v899
  %v901 = vsel %vm839, %v708, 0.0
  %v902 = vadd.f32 %v900, %v901
  %v903 = vsel %vm839, %v713, 0.0
  %v904 = vadd.f32 %v902, %v903
  %v905 = vsel %vm839, %v716, 0.0
  %v906 = vadd.f32 %v904, %v905
  %v907 = vsel %vm839, %v721, 0.0
  %v908 = vadd.f32 %v906, %v907
  %v909 = vsel %vm839, %v724, 0.0
  %v910 = vadd.f32 %v908, %v909
  %v911 = vsel %vm839, %v729, 0.0
  %v912 = vadd.f32 %v910, %v911
  %v913 = vsel %vm839, %v732, 0.0
  %v914 = vadd.f32 %v912, %v913
  %v915 = vsel %vm839, %v737, 0.0
  %v916 = vadd.f32 %v914, %v915
  %v917 = vsel %vm839, %v740, 0.0
  %v918 = vadd.f32 %v916, %v917
  %v919 = vsel %vm839, %v745, 0.0
  %v920 = vadd.f32 %v918, %v919
  %v921 = vsel %vm839, %v748, 0.0
  %v922 = vadd.f32 %v920, %v921
  %v923 = vsel %vm839, %v753, 0.0
  %v924 = vadd.f32 %v922, %v923
  %v925 = vsel %vm839, %v756, 0.0
  %v926 = vadd.f32 %v924, %v925
  %v927 = vsel %vm839, %v761, 0.0
  %v928 = vadd.f32 %v926, %v927
  %v929 = vsel %vm839, %v764, 0.0
  %v930 = vadd.f32 %v928, %v929
  %v931 = vsel %vm839, %v769, 0.0
  %v932 = vadd.f32 %v930, %v931
  %v933 = vsel %vm839, %v772, 0.0
  %v934 = vadd.f32 %v932, %v933
  %v935 = vsel %vm839, %v777, 0.0
  %v936 = vadd.f32 %v934, %v935
  %v937 = vsel %vm839, %v780, 0.0
  %v938 = vadd.f32 %v936, %v937
  %v939 = vsel %vm839, %v785, 0.0
  %v940 = vadd.f32 %v938, %v939
  %v941 = vsel %vm839, %v788, 0.0
  %v942 = vadd.f32 %v940, %v941
  %v943 = vsel %vm839, %v793, 0.0
  %v944 = vadd.f32 %v942, %v943
  %v945 = vsel %vm839, %v796, 0.0
  %v946 = vadd.f32 %v944, %v945
  %v947 = vsel %vm839, %v801, 0.0
  %v948 = vadd.f32 %v946, %v947
  %v949 = vsel %vm839, %v804, 0.0
  %v950 = vadd.f32 %v948, %v949
  %v951 = vsel %vm839, %v809, 0.0
  %v952 = vadd.f32 %v950, %v951
  %v953 = vsel %vm839, %v812, 0.0
  %v954 = vadd.f32 %v952, %v953
  %v955 = vsel %vm839, %v817, 0.0
  %v956 = vadd.f32 %v954, %v955
  %v957 = vsel %vm839, %v820, 0.0
  %v958 = vadd.f32 %v956, %v957
  %v959 = vsel %vm839, %v825, 0.0
  %v960 = vadd.f32 %v958, %v959
  %v961 = vsel %vm839, %v828, 0.0
  %v962 = vadd.f32 %v960, %v961
  %v963 = vsel %vm839, %v833, 0.0
  %v964 = vadd.f32 %v962, %v963
  %v965 = vsel %vm839, %v836, 0.0
  %v966 = vadd.f32 %v964, %v965
  %v967 = vrot.slane %v966, 4
  %v968 = vadd.f32 %v966, %v967
  %v969 = vrot.slane %v968, 2
  %v970 = vadd.f32 %v968, %v969
  %v971 = vrot.slane %v970, 1
  %v972 = vadd.f32 %v970, %v971
  %v973 = vmul.f32 %v972, 0.001953125
  %v974 = vsub.f32 %v585, %v973
  %v975 = vsub.f32 %v588, %v973
  %v976 = vsub.f32 %v593, %v973
  %v977 = vsub.f32 %v596, %v973
  %v978 = vsub.f32 %v601, %v973
  %v979 = vsub.f32 %v604, %v973
  %v980 = vsub.f32 %v609, %v973
  %v981 = vsub.f32 %v612, %v973
  %v982 = vsub.f32 %v617, %v973
  %v983 = vsub.f32 %v620, %v973
  %v984 = vsub.f32 %v625, %v973
  %v985 = vsub.f32 %v628, %v973
  %v986 = vsub.f32 %v633, %v973
  %v987 = vsub.f32 %v636, %v973
  %v988 = vsub.f32 %v641, %v973
  %v989 = vsub.f32 %v644, %v973
  %v990 = vsub.f32 %v649, %v973
  %v991 = vsub.f32 %v652, %v973
  %v992 = vsub.f32 %v657, %v973
  %v993 = vsub.f32 %v660, %v973
  %v994 = vsub.f32 %v665, %v973
  %v995 = vsub.f32 %v668, %v973
  %v996 = vsub.f32 %v673, %v973
  %v997 = vsub.f32 %v676, %v973
  %v998 = vsub.f32 %v681, %v973
  %v999 = vsub.f32 %v684, %v973
  %v1000 = vsub.f32 %v689, %v973
  %v1001 = vsub.f32 %v692, %v973
  %v1002 = vsub.f32 %v697, %v973
  %v1003 = vsub.f32 %v700, %v973
  %v1004 = vsub.f32 %v705, %v973
  %v1005 = vsub.f32 %v708, %v973
  %v1006 = vsub.f32 %v713, %v973
  %v1007 = vsub.f32 %v716, %v973
  %v1008 = vsub.f32 %v721, %v973
  %v1009 = vsub.f32 %v724, %v973
  %v1010 = vsub.f32 %v729, %v973
  %v1011 = vsub.f32 %v732, %v973
  %v1012 = vsub.f32 %v737, %v973
  %v1013 = vsub.f32 %v740, %v973
  %v1014 = vsub.f32 %v745, %v973
  %v1015 = vsub.f32 %v748, %v973
  %v1016 = vsub.f32 %v753, %v973
  %v1017 = vsub.f32 %v756, %v973
  %v1018 = vsub.f32 %v761, %v973
  %v1019 = vsub.f32 %v764, %v973
  %v1020 = vsub.f32 %v769, %v973
  %v1021 = vsub.f32 %v772, %v973
  %v1022 = vsub.f32 %v777, %v973
  %v1023 = vsub.f32 %v780, %v973
  %v1024 = vsub.f32 %v785, %v973
  %v1025 = vsub.f32 %v788, %v973
  %v1026 = vsub.f32 %v793, %v973
  %v1027 = vsub.f32 %v796, %v973
  %v1028 = vsub.f32 %v801, %v973
  %v1029 = vsub.f32 %v804, %v973
  %v1030 = vsub.f32 %v809, %v973
  %v1031 = vsub.f32 %v812, %v973
  %v1032 = vsub.f32 %v817, %v973
  %v1033 = vsub.f32 %v820, %v973
  %v1034 = vsub.f32 %v825, %v973
  %v1035 = vsub.f32 %v828, %v973
  %v1036 = vsub.f32 %v833, %v973
  %v1037 = vsub.f32 %v836, %v973
  %v1038 = vmul.f32 %v974, %v974
  %v1039 = vmul.f32 %v975, %v975
  %v1040 = vmul.f32 %v976, %v976
  %v1041 = vmul.f32 %v977, %v977
  %v1042 = vmul.f32 %v978, %v978
  %v1043 = vmul.f32 %v979, %v979
  %v1044 = vmul.f32 %v980, %v980
  %v1045 = vmul.f32 %v981, %v981
  %v1046 = vmul.f32 %v982, %v982
  %v1047 = vmul.f32 %v983, %v983
  %v1048 = vmul.f32 %v984, %v984
  %v1049 = vmul.f32 %v985, %v985
  %v1050 = vmul.f32 %v986, %v986
  %v1051 = vmul.f32 %v987, %v987
  %v1052 = vmul.f32 %v988, %v988
  %v1053 = vmul.f32 %v989, %v989
  %v1054 = vmul.f32 %v990, %v990
  %v1055 = vmul.f32 %v991, %v991
  %v1056 = vmul.f32 %v992, %v992
  %v1057 = vmul.f32 %v993, %v993
  %v1058 = vmul.f32 %v994, %v994
  %v1059 = vmul.f32 %v995, %v995
  %v1060 = vmul.f32 %v996, %v996
  %v1061 = vmul.f32 %v997, %v997
  %v1062 = vmul.f32 %v998, %v998
  %v1063 = vmul.f32 %v999, %v999
  %v1064 = vmul.f32 %v1000, %v1000
  %v1065 = vmul.f32 %v1001, %v1001
  %v1066 = vmul.f32 %v1002, %v1002
  %v1067 = vmul.f32 %v1003, %v1003
  %v1068 = vmul.f32 %v1004, %v1004
  %v1069 = vmul.f32 %v1005, %v1005
  %v1070 = vmul.f32 %v1006, %v1006
  %v1071 = vmul.f32 %v1007, %v1007
  %v1072 = vmul.f32 %v1008, %v1008
  %v1073 = vmul.f32 %v1009, %v1009
  %v1074 = vmul.f32 %v1010, %v1010
  %v1075 = vmul.f32 %v1011, %v1011
  %v1076 = vmul.f32 %v1012, %v1012
  %v1077 = vmul.f32 %v1013, %v1013
  %v1078 = vmul.f32 %v1014, %v1014
  %v1079 = vmul.f32 %v1015, %v1015
  %v1080 = vmul.f32 %v1016, %v1016
  %v1081 = vmul.f32 %v1017, %v1017
  %v1082 = vmul.f32 %v1018, %v1018
  %v1083 = vmul.f32 %v1019, %v1019
  %v1084 = vmul.f32 %v1020, %v1020
  %v1085 = vmul.f32 %v1021, %v1021
  %v1086 = vmul.f32 %v1022, %v1022
  %v1087 = vmul.f32 %v1023, %v1023
  %v1088 = vmul.f32 %v1024, %v1024
  %v1089 = vmul.f32 %v1025, %v1025
  %v1090 = vmul.f32 %v1026, %v1026
  %v1091 = vmul.f32 %v1027, %v1027
  %v1092 = vmul.f32 %v1028, %v1028
  %v1093 = vmul.f32 %v1029, %v1029
  %v1094 = vmul.f32 %v1030, %v1030
  %v1095 = vmul.f32 %v1031, %v1031
  %v1096 = vmul.f32 %v1032, %v1032
  %v1097 = vmul.f32 %v1033, %v1033
  %v1098 = vmul.f32 %v1034, %v1034
  %v1099 = vmul.f32 %v1035, %v1035
  %v1100 = vmul.f32 %v1036, %v1036
  %v1101 = vmul.f32 %v1037, %v1037
  %v1102 = vsel %vm839, %v1038, 0.0
  %v1103 = vsel %vm839, %v1039, 0.0
  %v1104 = vadd.f32 %v1102, %v1103
  %v1105 = vsel %vm839, %v1040, 0.0
  %v1106 = vadd.f32 %v1104, %v1105
  %v1107 = vsel %vm839, %v1041, 0.0
  %v1108 = vadd.f32 %v1106, %v1107
  %v1109 = vsel %vm839, %v1042, 0.0
  %v1110 = vadd.f32 %v1108, %v1109
  %v1111 = vsel %vm839, %v1043, 0.0
  %v1112 = vadd.f32 %v1110, %v1111
  %v1113 = vsel %vm839, %v1044, 0.0
  %v1114 = vadd.f32 %v1112, %v1113
  %v1115 = vsel %vm839, %v1045, 0.0
  %v1116 = vadd.f32 %v1114, %v1115
  %v1117 = vsel %vm839, %v1046, 0.0
  %v1118 = vadd.f32 %v1116, %v1117
  %v1119 = vsel %vm839, %v1047, 0.0
  %v1120 = vadd.f32 %v1118, %v1119
  %v1121 = vsel %vm839, %v1048, 0.0
  %v1122 = vadd.f32 %v1120, %v1121
  %v1123 = vsel %vm839, %v1049, 0.0
  %v1124 = vadd.f32 %v1122, %v1123
  %v1125 = vsel %vm839, %v1050, 0.0
  %v1126 = vadd.f32 %v1124, %v1125
  %v1127 = vsel %vm839, %v1051, 0.0
  %v1128 = vadd.f32 %v1126, %v1127
  %v1129 = vsel %vm839, %v1052, 0.0
  %v1130 = vadd.f32 %v1128, %v1129
  %v1131 = vsel %vm839, %v1053, 0.0
  %v1132 = vadd.f32 %v1130, %v1131
  %v1133 = vsel %vm839, %v1054, 0.0
  %v1134 = vadd.f32 %v1132, %v1133
  %v1135 = vsel %vm839, %v1055, 0.0
  %v1136 = vadd.f32 %v1134, %v1135
  %v1137 = vsel %vm839, %v1056, 0.0
  %v1138 = vadd.f32 %v1136, %v1137
  %v1139 = vsel %vm839, %v1057, 0.0
  %v1140 = vadd.f32 %v1138, %v1139
  %v1141 = vsel %vm839, %v1058, 0.0
  %v1142 = vadd.f32 %v1140, %v1141
  %v1143 = vsel %vm839, %v1059, 0.0
  %v1144 = vadd.f32 %v1142, %v1143
  %v1145 = vsel %vm839, %v1060, 0.0
  %v1146 = vadd.f32 %v1144, %v1145
  %v1147 = vsel %vm839, %v1061, 0.0
  %v1148 = vadd.f32 %v1146, %v1147
  %v1149 = vsel %vm839, %v1062, 0.0
  %v1150 = vadd.f32 %v1148, %v1149
  %v1151 = vsel %vm839, %v1063, 0.0
  %v1152 = vadd.f32 %v1150, %v1151
  %v1153 = vsel %vm839, %v1064, 0.0
  %v1154 = vadd.f32 %v1152, %v1153
  %v1155 = vsel %vm839, %v1065, 0.0
  %v1156 = vadd.f32 %v1154, %v1155
  %v1157 = vsel %vm839, %v1066, 0.0
  %v1158 = vadd.f32 %v1156, %v1157
  %v1159 = vsel %vm839, %v1067, 0.0
  %v1160 = vadd.f32 %v1158, %v1159
  %v1161 = vsel %vm839, %v1068, 0.0
  %v1162 = vadd.f32 %v1160, %v1161
  %v1163 = vsel %vm839, %v1069, 0.0
  %v1164 = vadd.f32 %v1162, %v1163
  %v1165 = vsel %vm839, %v1070, 0.0
  %v1166 = vadd.f32 %v1164, %v1165
  %v1167 = vsel %vm839, %v1071, 0.0
  %v1168 = vadd.f32 %v1166, %v1167
  %v1169 = vsel %vm839, %v1072, 0.0
  %v1170 = vadd.f32 %v1168, %v1169
  %v1171 = vsel %vm839, %v1073, 0.0
  %v1172 = vadd.f32 %v1170, %v1171
  %v1173 = vsel %vm839, %v1074, 0.0
  %v1174 = vadd.f32 %v1172, %v1173
  %v1175 = vsel %vm839, %v1075, 0.0
  %v1176 = vadd.f32 %v1174, %v1175
  %v1177 = vsel %vm839, %v1076, 0.0
  %v1178 = vadd.f32 %v1176, %v1177
  %v1179 = vsel %vm839, %v1077, 0.0
  %v1180 = vadd.f32 %v1178, %v1179
  %v1181 = vsel %vm839, %v1078, 0.0
  %v1182 = vadd.f32 %v1180, %v1181
  %v1183 = vsel %vm839, %v1079, 0.0
  %v1184 = vadd.f32 %v1182, %v1183
  %v1185 = vsel %vm839, %v1080, 0.0
  %v1186 = vadd.f32 %v1184, %v1185
  %v1187 = vsel %vm839, %v1081, 0.0
  %v1188 = vadd.f32 %v1186, %v1187
  %v1189 = vsel %vm839, %v1082, 0.0
  %v1190 = vadd.f32 %v1188, %v1189
  %v1191 = vsel %vm839, %v1083, 0.0
  %v1192 = vadd.f32 %v1190, %v1191
  %v1193 = vsel %vm839, %v1084, 0.0
  %v1194 = vadd.f32 %v1192, %v1193
  %v1195 = vsel %vm839, %v1085, 0.0
  %v1196 = vadd.f32 %v1194, %v1195
  %v1197 = vsel %vm839, %v1086, 0.0
  %v1198 = vadd.f32 %v1196, %v1197
  %v1199 = vsel %vm839, %v1087, 0.0
  %v1200 = vadd.f32 %v1198, %v1199
  %v1201 = vsel %vm839, %v1088, 0.0
  %v1202 = vadd.f32 %v1200, %v1201
  %v1203 = vsel %vm839, %v1089, 0.0
  %v1204 = vadd.f32 %v1202, %v1203
  %v1205 = vsel %vm839, %v1090, 0.0
  %v1206 = vadd.f32 %v1204, %v1205
  %v1207 = vsel %vm839, %v1091, 0.0
  %v1208 = vadd.f32 %v1206, %v1207
  %v1209 = vsel %vm839, %v1092, 0.0
  %v1210 = vadd.f32 %v1208, %v1209
  %v1211 = vsel %vm839, %v1093, 0.0
  %v1212 = vadd.f32 %v1210, %v1211
  %v1213 = vsel %vm839, %v1094, 0.0
  %v1214 = vadd.f32 %v1212, %v1213
  %v1215 = vsel %vm839, %v1095, 0.0
  %v1216 = vadd.f32 %v1214, %v1215
  %v1217 = vsel %vm839, %v1096, 0.0
  %v1218 = vadd.f32 %v1216, %v1217
  %v1219 = vsel %vm839, %v1097, 0.0
  %v1220 = vadd.f32 %v1218, %v1219
  %v1221 = vsel %vm839, %v1098, 0.0
  %v1222 = vadd.f32 %v1220, %v1221
  %v1223 = vsel %vm839, %v1099, 0.0
  %v1224 = vadd.f32 %v1222, %v1223
  %v1225 = vsel %vm839, %v1100, 0.0
  %v1226 = vadd.f32 %v1224, %v1225
  %v1227 = vsel %vm839, %v1101, 0.0
  %v1228 = vadd.f32 %v1226, %v1227
  %v1229 = vrot.slane %v1228, 4
  %v1230 = vadd.f32 %v1228, %v1229
  %v1231 = vrot.slane %v1230, 2
  %v1232 = vadd.f32 %v1230, %v1231
  %v1233 = vrot.slane %v1232, 1
  %v1234 = vadd.f32 %v1232, %v1233
  %v1235 = vmul.f32 %v1234, 0.001953125
  %v1236 = vadd.f32 %v1235, 1e-05
  %v1237 = vrsqrt.pop %v1236
  %v1238 = vmul.f32 %v974, %v1237
  %v1239 = vmul.f32 %v975, %v1237
  %v1240 = vmul.f32 %v976, %v1237
  %v1241 = vmul.f32 %v977, %v1237
  %v1242 = vmul.f32 %v978, %v1237
  %v1243 = vmul.f32 %v979, %v1237
  %v1244 = vmul.f32 %v980, %v1237
  %v1245 = vmul.f32 %v981, %v1237
  %v1246 = vmul.f32 %v982, %v1237
  %v1247 = vmul.f32 %v983, %v1237
  %v1248 = vmul.f32 %v984, %v1237
  %v1249 = vmul.f32 %v985, %v1237
  %v1250 = vmul.f32 %v986, %v1237
  %v1251 = vmul.f32 %v987, %v1237
  %v1252 = vmul.f32 %v988, %v1237
  %v1253 = vmul.f32 %v989, %v1237
  %v1254 = vmul.f32 %v990, %v1237
  %v1255 = vmul.f32 %v991, %v1237
  %v1256 = vmul.f32 %v992, %v1237
  %v1257 = vmul.f32 %v993, %v1237
  %v1258 = vmul.f32 %v994, %v1237
  %v1259 = vmul.f32 %v995, %v1237
  %v1260 = vmul.f32 %v996, %v1237
  %v1261 = vmul.f32 %v997, %v1237
  %v1262 = vmul.f32 %v998, %v1237
  %v1263 = vmul.f32 %v999, %v1237
  %v1264 = vmul.f32 %v1000, %v1237
  %v1265 = vmul.f32 %v1001, %v1237
  %v1266 = vmul.f32 %v1002, %v1237
  %v1267 = vmul.f32 %v1003, %v1237
  %v1268 = vmul.f32 %v1004, %v1237
  %v1269 = vmul.f32 %v1005, %v1237
  %v1270 = vmul.f32 %v1006, %v1237
  %v1271 = vmul.f32 %v1007, %v1237
  %v1272 = vmul.f32 %v1008, %v1237
  %v1273 = vmul.f32 %v1009, %v1237
  %v1274 = vmul.f32 %v1010, %v1237
  %v1275 = vmul.f32 %v1011, %v1237
  %v1276 = vmul.f32 %v1012, %v1237
  %v1277 = vmul.f32 %v1013, %v1237
  %v1278 = vmul.f32 %v1014, %v1237
  %v1279 = vmul.f32 %v1015, %v1237
  %v1280 = vmul.f32 %v1016, %v1237
  %v1281 = vmul.f32 %v1017, %v1237
  %v1282 = vmul.f32 %v1018, %v1237
  %v1283 = vmul.f32 %v1019, %v1237
  %v1284 = vmul.f32 %v1020, %v1237
  %v1285 = vmul.f32 %v1021, %v1237
  %v1286 = vmul.f32 %v1022, %v1237
  %v1287 = vmul.f32 %v1023, %v1237
  %v1288 = vmul.f32 %v1024, %v1237
  %v1289 = vmul.f32 %v1025, %v1237
  %v1290 = vmul.f32 %v1026, %v1237
  %v1291 = vmul.f32 %v1027, %v1237
  %v1292 = vmul.f32 %v1028, %v1237
  %v1293 = vmul.f32 %v1029, %v1237
  %v1294 = vmul.f32 %v1030, %v1237
  %v1295 = vmul.f32 %v1031, %v1237
  %v1296 = vmul.f32 %v1032, %v1237
  %v1297 = vmul.f32 %v1033, %v1237
  %v1298 = vmul.f32 %v1034, %v1237
  %v1299 = vmul.f32 %v1035, %v1237
  %v1300 = vmul.f32 %v1036, %v1237
  %v1301 = vmul.f32 %v1037, %v1237
  %v1302 = vld [vmem:[%s2] sm:$0x1]
  %v1304 = vlaneseq
  %v1305 = vshrl.u32 %v1304, 7
  %v1306 = vsub.s32 0, %v1305
  %v1307 = vrot.slane %v1302, %v1306
  %v1309 = vmul.f32 %v1238, %v1307
  %v1310 = vmul.f32 %v1239, %v1307
  %v1311 = vmul.f32 %v1240, %v1307
  %v1312 = vmul.f32 %v1241, %v1307
  %v1313 = vmul.f32 %v1242, %v1307
  %v1314 = vmul.f32 %v1243, %v1307
  %v1315 = vmul.f32 %v1244, %v1307
  %v1316 = vmul.f32 %v1245, %v1307
  %v1317 = vmul.f32 %v1246, %v1307
  %v1318 = vmul.f32 %v1247, %v1307
  %v1319 = vmul.f32 %v1248, %v1307
  %v1320 = vmul.f32 %v1249, %v1307
  %v1321 = vmul.f32 %v1250, %v1307
  %v1322 = vmul.f32 %v1251, %v1307
  %v1323 = vmul.f32 %v1252, %v1307
  %v1324 = vmul.f32 %v1253, %v1307
  %v1325 = vmul.f32 %v1254, %v1307
  %v1326 = vmul.f32 %v1255, %v1307
  %v1327 = vmul.f32 %v1256, %v1307
  %v1328 = vmul.f32 %v1257, %v1307
  %v1329 = vmul.f32 %v1258, %v1307
  %v1330 = vmul.f32 %v1259, %v1307
  %v1331 = vmul.f32 %v1260, %v1307
  %v1332 = vmul.f32 %v1261, %v1307
  %v1333 = vmul.f32 %v1262, %v1307
  %v1334 = vmul.f32 %v1263, %v1307
  %v1335 = vmul.f32 %v1264, %v1307
  %v1336 = vmul.f32 %v1265, %v1307
  %v1337 = vmul.f32 %v1266, %v1307
  %v1338 = vmul.f32 %v1267, %v1307
  %v1339 = vmul.f32 %v1268, %v1307
  %v1340 = vmul.f32 %v1269, %v1307
  %v1341 = vmul.f32 %v1270, %v1307
  %v1342 = vmul.f32 %v1271, %v1307
  %v1343 = vmul.f32 %v1272, %v1307
  %v1344 = vmul.f32 %v1273, %v1307
  %v1345 = vmul.f32 %v1274, %v1307
  %v1346 = vmul.f32 %v1275, %v1307
  %v1347 = vmul.f32 %v1276, %v1307
  %v1348 = vmul.f32 %v1277, %v1307
  %v1349 = vmul.f32 %v1278, %v1307
  %v1350 = vmul.f32 %v1279, %v1307
  %v1351 = vmul.f32 %v1280, %v1307
  %v1352 = vmul.f32 %v1281, %v1307
  %v1353 = vmul.f32 %v1282, %v1307
  %v1354 = vmul.f32 %v1283, %v1307
  %v1355 = vmul.f32 %v1284, %v1307
  %v1356 = vmul.f32 %v1285, %v1307
  %v1357 = vmul.f32 %v1286, %v1307
  %v1358 = vmul.f32 %v1287, %v1307
  %v1359 = vmul.f32 %v1288, %v1307
  %v1360 = vmul.f32 %v1289, %v1307
  %v1361 = vmul.f32 %v1290, %v1307
  %v1362 = vmul.f32 %v1291, %v1307
  %v1363 = vmul.f32 %v1292, %v1307
  %v1364 = vmul.f32 %v1293, %v1307
  %v1365 = vmul.f32 %v1294, %v1307
  %v1366 = vmul.f32 %v1295, %v1307
  %v1367 = vmul.f32 %v1296, %v1307
  %v1368 = vmul.f32 %v1297, %v1307
  %v1369 = vmul.f32 %v1298, %v1307
  %v1370 = vmul.f32 %v1299, %v1307
  %v1371 = vmul.f32 %v1300, %v1307
  %v1372 = vmul.f32 %v1301, %v1307
  %v1373 = vld [vmem:[%s3] sm:$0x1]
  %v1375 = vlaneseq
  %v1376 = vshrl.u32 %v1375, 7
  %v1377 = vsub.s32 0, %v1376
  %v1378 = vrot.slane %v1373, %v1377
  %v1380 = vadd.f32 %v1309, %v1378
  %v1381 = vadd.f32 %v1310, %v1378
  %v1382 = vadd.f32 %v1311, %v1378
  %v1383 = vadd.f32 %v1312, %v1378
  %v1384 = vadd.f32 %v1313, %v1378
  %v1385 = vadd.f32 %v1314, %v1378
  %v1386 = vadd.f32 %v1315, %v1378
  %v1387 = vadd.f32 %v1316, %v1378
  %v1388 = vadd.f32 %v1317, %v1378
  %v1389 = vadd.f32 %v1318, %v1378
  %v1390 = vadd.f32 %v1319, %v1378
  %v1391 = vadd.f32 %v1320, %v1378
  %v1392 = vadd.f32 %v1321, %v1378
  %v1393 = vadd.f32 %v1322, %v1378
  %v1394 = vadd.f32 %v1323, %v1378
  %v1395 = vadd.f32 %v1324, %v1378
  %v1396 = vadd.f32 %v1325, %v1378
  %v1397 = vadd.f32 %v1326, %v1378
  %v1398 = vadd.f32 %v1327, %v1378
  %v1399 = vadd.f32 %v1328, %v1378
  %v1400 = vadd.f32 %v1329, %v1378
  %v1401 = vadd.f32 %v1330, %v1378
  %v1402 = vadd.f32 %v1331, %v1378
  %v1403 = vadd.f32 %v1332, %v1378
  %v1404 = vadd.f32 %v1333, %v1378
  %v1405 = vadd.f32 %v1334, %v1378
  %v1406 = vadd.f32 %v1335, %v1378
  %v1407 = vadd.f32 %v1336, %v1378
  %v1408 = vadd.f32 %v1337, %v1378
  %v1409 = vadd.f32 %v1338, %v1378
  %v1410 = vadd.f32 %v1339, %v1378
  %v1411 = vadd.f32 %v1340, %v1378
  %v1412 = vadd.f32 %v1341, %v1378
  %v1413 = vadd.f32 %v1342, %v1378
  %v1414 = vadd.f32 %v1343, %v1378
  %v1415 = vadd.f32 %v1344, %v1378
  %v1416 = vadd.f32 %v1345, %v1378
  %v1417 = vadd.f32 %v1346, %v1378
  %v1418 = vadd.f32 %v1347, %v1378
  %v1419 = vadd.f32 %v1348, %v1378
  %v1420 = vadd.f32 %v1349, %v1378
  %v1421 = vadd.f32 %v1350, %v1378
  %v1422 = vadd.f32 %v1351, %v1378
  %v1423 = vadd.f32 %v1352, %v1378
  %v1424 = vadd.f32 %v1353, %v1378
  %v1425 = vadd.f32 %v1354, %v1378
  %v1426 = vadd.f32 %v1355, %v1378
  %v1427 = vadd.f32 %v1356, %v1378
  %v1428 = vadd.f32 %v1357, %v1378
  %v1429 = vadd.f32 %v1358, %v1378
  %v1430 = vadd.f32 %v1359, %v1378
  %v1431 = vadd.f32 %v1360, %v1378
  %v1432 = vadd.f32 %v1361, %v1378
  %v1433 = vadd.f32 %v1362, %v1378
  %v1434 = vadd.f32 %v1363, %v1378
  %v1435 = vadd.f32 %v1364, %v1378
  %v1436 = vadd.f32 %v1365, %v1378
  %v1437 = vadd.f32 %v1366, %v1378
  %v1438 = vadd.f32 %v1367, %v1378
  %v1439 = vadd.f32 %v1368, %v1378
  %v1440 = vadd.f32 %v1369, %v1378
  %v1441 = vadd.f32 %v1370, %v1378
  %v1442 = vadd.f32 %v1371, %v1378
  %v1443 = vadd.f32 %v1372, %v1378
  %v1444 = vmax.f32 %v1380, 0.0
  %v1445 = vmax.f32 %v1381, 0.0
  %v1446 = vmax.f32 %v1382, 0.0
  %v1447 = vmax.f32 %v1383, 0.0
  %v1448 = vmax.f32 %v1384, 0.0
  %v1449 = vmax.f32 %v1385, 0.0
  %v1450 = vmax.f32 %v1386, 0.0
  %v1451 = vmax.f32 %v1387, 0.0
  %v1452 = vmax.f32 %v1388, 0.0
  %v1453 = vmax.f32 %v1389, 0.0
  %v1454 = vmax.f32 %v1390, 0.0
  %v1455 = vmax.f32 %v1391, 0.0
  %v1456 = vmax.f32 %v1392, 0.0
  %v1457 = vmax.f32 %v1393, 0.0
  %v1458 = vmax.f32 %v1394, 0.0
  %v1459 = vmax.f32 %v1395, 0.0
  %v1460 = vmax.f32 %v1396, 0.0
  %v1461 = vmax.f32 %v1397, 0.0
  %v1462 = vmax.f32 %v1398, 0.0
  %v1463 = vmax.f32 %v1399, 0.0
  %v1464 = vmax.f32 %v1400, 0.0
  %v1465 = vmax.f32 %v1401, 0.0
  %v1466 = vmax.f32 %v1402, 0.0
  %v1467 = vmax.f32 %v1403, 0.0
  %v1468 = vmax.f32 %v1404, 0.0
  %v1469 = vmax.f32 %v1405, 0.0
  %v1470 = vmax.f32 %v1406, 0.0
  %v1471 = vmax.f32 %v1407, 0.0
  %v1472 = vmax.f32 %v1408, 0.0
  %v1473 = vmax.f32 %v1409, 0.0
  %v1474 = vmax.f32 %v1410, 0.0
  %v1475 = vmax.f32 %v1411, 0.0
  %v1476 = vmax.f32 %v1412, 0.0
  %v1477 = vmax.f32 %v1413, 0.0
  %v1478 = vmax.f32 %v1414, 0.0
  %v1479 = vmax.f32 %v1415, 0.0
  %v1480 = vmax.f32 %v1416, 0.0
  %v1481 = vmax.f32 %v1417, 0.0
  %v1482 = vmax.f32 %v1418, 0.0
  %v1483 = vmax.f32 %v1419, 0.0
  %v1484 = vmax.f32 %v1420, 0.0
  %v1485 = vmax.f32 %v1421, 0.0
  %v1486 = vmax.f32 %v1422, 0.0
  %v1487 = vmax.f32 %v1423, 0.0
  %v1488 = vmax.f32 %v1424, 0.0
  %v1489 = vmax.f32 %v1425, 0.0
  %v1490 = vmax.f32 %v1426, 0.0
  %v1491 = vmax.f32 %v1427, 0.0
  %v1492 = vmax.f32 %v1428, 0.0
  %v1493 = vmax.f32 %v1429, 0.0
  %v1494 = vmax.f32 %v1430, 0.0
  %v1495 = vmax.f32 %v1431, 0.0
  %v1496 = vmax.f32 %v1432, 0.0
  %v1497 = vmax.f32 %v1433, 0.0
  %v1498 = vmax.f32 %v1434, 0.0
  %v1499 = vmax.f32 %v1435, 0.0
  %v1500 = vmax.f32 %v1436, 0.0
  %v1501 = vmax.f32 %v1437, 0.0
  %v1502 = vmax.f32 %v1438, 0.0
  %v1503 = vmax.f32 %v1439, 0.0
  %v1504 = vmax.f32 %v1440, 0.0
  %v1505 = vmax.f32 %v1441, 0.0
  %v1506 = vmax.f32 %v1442, 0.0
  %v1507 = vmax.f32 %v1443, 0.0
  %v1508 = vpack.c.bf16 %v1445, %v1444
  %v1509 = vpack.c.bf16 %v1447, %v1446
  %v1510 = vpack.c.bf16 %v1449, %v1448
  %v1511 = vpack.c.bf16 %v1451, %v1450
  %v1512 = vpack.c.bf16 %v1453, %v1452
  %v1513 = vpack.c.bf16 %v1455, %v1454
  %v1514 = vpack.c.bf16 %v1457, %v1456
  %v1515 = vpack.c.bf16 %v1459, %v1458
  %v1516 = vpack.c.bf16 %v1461, %v1460
  %v1517 = vpack.c.bf16 %v1463, %v1462
  %v1518 = vpack.c.bf16 %v1465, %v1464
  %v1519 = vpack.c.bf16 %v1467, %v1466
  %v1520 = vpack.c.bf16 %v1469, %v1468
  %v1521 = vpack.c.bf16 %v1471, %v1470
  %v1522 = vpack.c.bf16 %v1473, %v1472
  %v1523 = vpack.c.bf16 %v1475, %v1474
  %v1524 = vpack.c.bf16 %v1477, %v1476
  %v1525 = vpack.c.bf16 %v1479, %v1478
  %v1526 = vpack.c.bf16 %v1481, %v1480
  %v1527 = vpack.c.bf16 %v1483, %v1482
  %v1528 = vpack.c.bf16 %v1485, %v1484
  %v1529 = vpack.c.bf16 %v1487, %v1486
  %v1530 = vpack.c.bf16 %v1489, %v1488
  %v1531 = vpack.c.bf16 %v1491, %v1490
  %v1532 = vpack.c.bf16 %v1493, %v1492
  %v1533 = vpack.c.bf16 %v1495, %v1494
  %v1534 = vpack.c.bf16 %v1497, %v1496
  %v1535 = vpack.c.bf16 %v1499, %v1498
  %v1536 = vpack.c.bf16 %v1501, %v1500
  %v1537 = vpack.c.bf16 %v1503, %v1502
  %v1538 = vpack.c.bf16 %v1505, %v1504
  %v1539 = vpack.c.bf16 %v1507, %v1506
  %v1572 = vunpack.c.l.b16 %v1508
  %v1573 = vunpack.c.h.b16 %v1508
  %v1574 = vunpack.c.l.b16 %v1509
  %v1575 = vunpack.c.h.b16 %v1509
  %v1576 = vunpack.c.l.b16 %v1510
  %v1577 = vunpack.c.h.b16 %v1510
  %v1578 = vunpack.c.l.b16 %v1511
  %v1579 = vunpack.c.h.b16 %v1511
  %v1580 = vunpack.c.l.b16 %v1512
  %v1581 = vunpack.c.h.b16 %v1512
  %v1582 = vunpack.c.l.b16 %v1513
  %v1583 = vunpack.c.h.b16 %v1513
  %v1584 = vunpack.c.l.b16 %v1514
  %v1585 = vunpack.c.h.b16 %v1514
  %v1586 = vunpack.c.l.b16 %v1515
  %v1587 = vunpack.c.h.b16 %v1515
  %v1588 = vunpack.c.l.b16 %v1516
  %v1589 = vunpack.c.h.b16 %v1516
  %v1590 = vunpack.c.l.b16 %v1517
  %v1591 = vunpack.c.h.b16 %v1517
  %v1592 = vunpack.c.l.b16 %v1518
  %v1593 = vunpack.c.h.b16 %v1518
  %v1594 = vunpack.c.l.b16 %v1519
  %v1595 = vunpack.c.h.b16 %v1519
  %v1596 = vunpack.c.l.b16 %v1520
  %v1597 = vunpack.c.h.b16 %v1520
  %v1598 = vunpack.c.l.b16 %v1521
  %v1599 = vunpack.c.h.b16 %v1521
  %v1600 = vunpack.c.l.b16 %v1522
  %v1601 = vunpack.c.h.b16 %v1522
  %v1602 = vunpack.c.l.b16 %v1523
  %v1603 = vunpack.c.h.b16 %v1523
  %v1604 = vunpack.c.l.b16 %v1524
  %v1605 = vunpack.c.h.b16 %v1524
  %v1606 = vunpack.c.l.b16 %v1525
  %v1607 = vunpack.c.h.b16 %v1525
  %v1608 = vunpack.c.l.b16 %v1526
  %v1609 = vunpack.c.h.b16 %v1526
  %v1610 = vunpack.c.l.b16 %v1527
  %v1611 = vunpack.c.h.b16 %v1527
  %v1612 = vunpack.c.l.b16 %v1528
  %v1613 = vunpack.c.h.b16 %v1528
  %v1614 = vunpack.c.l.b16 %v1529
  %v1615 = vunpack.c.h.b16 %v1529
  %v1616 = vunpack.c.l.b16 %v1530
  %v1617 = vunpack.c.h.b16 %v1530
  %v1618 = vunpack.c.l.b16 %v1531
  %v1619 = vunpack.c.h.b16 %v1531
  %v1620 = vunpack.c.l.b16 %v1532
  %v1621 = vunpack.c.h.b16 %v1532
  %v1622 = vunpack.c.l.b16 %v1533
  %v1623 = vunpack.c.h.b16 %v1533
  %v1624 = vunpack.c.l.b16 %v1534
  %v1625 = vunpack.c.h.b16 %v1534
  %v1626 = vunpack.c.l.b16 %v1535
  %v1627 = vunpack.c.h.b16 %v1535
  %v1628 = vunpack.c.l.b16 %v1536
  %v1629 = vunpack.c.h.b16 %v1536
  %v1630 = vunpack.c.l.b16 %v1537
  %v1631 = vunpack.c.h.b16 %v1537
  %v1632 = vunpack.c.l.b16 %v1538
  %v1633 = vunpack.c.h.b16 %v1538
  %v1634 = vunpack.c.l.b16 %v1539
  %v1635 = vunpack.c.h.b16 %v1539
  %v1636 = vpack.c.b16 %v1572, %v1572
  %v1637 = vpack.c.b16 %v1573, %v1573
  %v1638 = vpack.c.b16 %v1574, %v1574
  %v1639 = vpack.c.b16 %v1575, %v1575
  %v1640 = vpack.c.b16 %v1576, %v1576
  %v1641 = vpack.c.b16 %v1577, %v1577
  %v1642 = vpack.c.b16 %v1578, %v1578
  %v1643 = vpack.c.b16 %v1579, %v1579
  %v1644 = vpack.c.b16 %v1580, %v1580
  %v1645 = vpack.c.b16 %v1581, %v1581
  %v1646 = vpack.c.b16 %v1582, %v1582
  %v1647 = vpack.c.b16 %v1583, %v1583
  %v1648 = vpack.c.b16 %v1584, %v1584
  %v1649 = vpack.c.b16 %v1585, %v1585
  %v1650 = vpack.c.b16 %v1586, %v1586
  %v1651 = vpack.c.b16 %v1587, %v1587
  %v1652 = vpack.c.b16 %v1588, %v1588
  %v1653 = vpack.c.b16 %v1589, %v1589
  %v1654 = vpack.c.b16 %v1590, %v1590
  %v1655 = vpack.c.b16 %v1591, %v1591
  %v1656 = vpack.c.b16 %v1592, %v1592
  %v1657 = vpack.c.b16 %v1593, %v1593
  %v1658 = vpack.c.b16 %v1594, %v1594
  %v1659 = vpack.c.b16 %v1595, %v1595
  %v1660 = vpack.c.b16 %v1596, %v1596
  %v1661 = vpack.c.b16 %v1597, %v1597
  %v1662 = vpack.c.b16 %v1598, %v1598
  %v1663 = vpack.c.b16 %v1599, %v1599
  %v1664 = vpack.c.b16 %v1600, %v1600
  %v1665 = vpack.c.b16 %v1601, %v1601
  %v1666 = vpack.c.b16 %v1602, %v1602
  %v1667 = vpack.c.b16 %v1603, %v1603
  %v1668 = vpack.c.b16 %v1604, %v1604
  %v1669 = vpack.c.b16 %v1605, %v1605
  %v1670 = vpack.c.b16 %v1606, %v1606
  %v1671 = vpack.c.b16 %v1607, %v1607
  %v1672 = vpack.c.b16 %v1608, %v1608
  %v1673 = vpack.c.b16 %v1609, %v1609
  %v1674 = vpack.c.b16 %v1610, %v1610
  %v1675 = vpack.c.b16 %v1611, %v1611
  %v1676 = vpack.c.b16 %v1612, %v1612
  %v1677 = vpack.c.b16 %v1613, %v1613
  %v1678 = vpack.c.b16 %v1614, %v1614
  %v1679 = vpack.c.b16 %v1615, %v1615
  %v1680 = vpack.c.b16 %v1616, %v1616
  %v1681 = vpack.c.b16 %v1617, %v1617
  %v1682 = vpack.c.b16 %v1618, %v1618
  %v1683 = vpack.c.b16 %v1619, %v1619
  %v1684 = vpack.c.b16 %v1620, %v1620
  %v1685 = vpack.c.b16 %v1621, %v1621
  %v1686 = vpack.c.b16 %v1622, %v1622
  %v1687 = vpack.c.b16 %v1623, %v1623
  %v1688 = vpack.c.b16 %v1624, %v1624
  %v1689 = vpack.c.b16 %v1625, %v1625
  %v1690 = vpack.c.b16 %v1626, %v1626
  %v1691 = vpack.c.b16 %v1627, %v1627
  %v1692 = vpack.c.b16 %v1628, %v1628
  %v1693 = vpack.c.b16 %v1629, %v1629
  %v1694 = vpack.c.b16 %v1630, %v1630
  %v1695 = vpack.c.b16 %v1631, %v1631
  %v1696 = vpack.c.b16 %v1632, %v1632
  %v1697 = vpack.c.b16 %v1633, %v1633
  %v1698 = vpack.c.b16 %v1634, %v1634
  %v1699 = vpack.c.b16 %v1635, %v1635
  %vm1764 = vcmask 519168
  %1765 = vst.msk [vmem:[%s4] sm:$0xf] %vm1764, %v1636
  %1766 = vst.msk [vmem:[%s4 + $0x4] sm:$0xf] %vm1764, %v1637
  %1767 = vst.msk [vmem:[%s4 + $0x8] sm:$0xf] %vm1764, %v1638
  %1768 = vst.msk [vmem:[%s4 + $0xc] sm:$0xf] %vm1764, %v1639
  %1769 = vst.msk [vmem:[%s4 + $0x10] sm:$0xf] %vm1764, %v1640
  %1770 = vst.msk [vmem:[%s4 + $0x14] sm:$0xf] %vm1764, %v1641
  %1771 = vst.msk [vmem:[%s4 + $0x18] sm:$0xf] %vm1764, %v1642
  %1772 = vst.msk [vmem:[%s4 + $0x1c] sm:$0xf] %vm1764, %v1643
  %1773 = vst.msk [vmem:[%s4 + $0x20] sm:$0xf] %vm1764, %v1644
  %1774 = vst.msk [vmem:[%s4 + $0x24] sm:$0xf] %vm1764, %v1645
  %1775 = vst.msk [vmem:[%s4 + $0x28] sm:$0xf] %vm1764, %v1646
  %1776 = vst.msk [vmem:[%s4 + $0x2c] sm:$0xf] %vm1764, %v1647
  %1777 = vst.msk [vmem:[%s4 + $0x30] sm:$0xf] %vm1764, %v1648
  %1778 = vst.msk [vmem:[%s4 + $0x34] sm:$0xf] %vm1764, %v1649
  %1779 = vst.msk [vmem:[%s4 + $0x38] sm:$0xf] %vm1764, %v1650
  %1780 = vst.msk [vmem:[%s4 + $0x3c] sm:$0xf] %vm1764, %v1651
  %1781 = vst.msk [vmem:[%s4 + $0x40] sm:$0xf] %vm1764, %v1652
  %1782 = vst.msk [vmem:[%s4 + $0x44] sm:$0xf] %vm1764, %v1653
  %1783 = vst.msk [vmem:[%s4 + $0x48] sm:$0xf] %vm1764, %v1654
  %1784 = vst.msk [vmem:[%s4 + $0x4c] sm:$0xf] %vm1764, %v1655
  %1785 = vst.msk [vmem:[%s4 + $0x50] sm:$0xf] %vm1764, %v1656
  %1786 = vst.msk [vmem:[%s4 + $0x54] sm:$0xf] %vm1764, %v1657
  %1787 = vst.msk [vmem:[%s4 + $0x58] sm:$0xf] %vm1764, %v1658
  %1788 = vst.msk [vmem:[%s4 + $0x5c] sm:$0xf] %vm1764, %v1659
  %1789 = vst.msk [vmem:[%s4 + $0x60] sm:$0xf] %vm1764, %v1660
  %1790 = vst.msk [vmem:[%s4 + $0x64] sm:$0xf] %vm1764, %v1661
  %1791 = vst.msk [vmem:[%s4 + $0x68] sm:$0xf] %vm1764, %v1662
  %1792 = vst.msk [vmem:[%s4 + $0x6c] sm:$0xf] %vm1764, %v1663
  %1793 = vst.msk [vmem:[%s4 + $0x70] sm:$0xf] %vm1764, %v1664
  %1794 = vst.msk [vmem:[%s4 + $0x74] sm:$0xf] %vm1764, %v1665
  %1795 = vst.msk [vmem:[%s4 + $0x78] sm:$0xf] %vm1764, %v1666
  %1796 = vst.msk [vmem:[%s4 + $0x7c] sm:$0xf] %vm1764, %v1667
  %1797 = vst.msk [vmem:[%s4 + $0x80] sm:$0xf] %vm1764, %v1668
  %1798 = vst.msk [vmem:[%s4 + $0x84] sm:$0xf] %vm1764, %v1669
  %1799 = vst.msk [vmem:[%s4 + $0x88] sm:$0xf] %vm1764, %v1670
  %1800 = vst.msk [vmem:[%s4 + $0x8c] sm:$0xf] %vm1764, %v1671
  %1801 = vst.msk [vmem:[%s4 + $0x90] sm:$0xf] %vm1764, %v1672
  %1802 = vst.msk [vmem:[%s4 + $0x94] sm:$0xf] %vm1764, %v1673
  %1803 = vst.msk [vmem:[%s4 + $0x98] sm:$0xf] %vm1764, %v1674
  %1804 = vst.msk [vmem:[%s4 + $0x9c] sm:$0xf] %vm1764, %v1675
  %1805 = vst.msk [vmem:[%s4 + $0xa0] sm:$0xf] %vm1764, %v1676
  %1806 = vst.msk [vmem:[%s4 + $0xa4] sm:$0xf] %vm1764, %v1677
  %1807 = vst.msk [vmem:[%s4 + $0xa8] sm:$0xf] %vm1764, %v1678
  %1808 = vst.msk [vmem:[%s4 + $0xac] sm:$0xf] %vm1764, %v1679
  %1809 = vst.msk [vmem:[%s4 + $0xb0] sm:$0xf] %vm1764, %v1680
  %1810 = vst.msk [vmem:[%s4 + $0xb4] sm:$0xf] %vm1764, %v1681
  %1811 = vst.msk [vmem:[%s4 + $0xb8] sm:$0xf] %vm1764, %v1682
  %1812 = vst.msk [vmem:[%s4 + $0xbc] sm:$0xf] %vm1764, %v1683
  %1813 = vst.msk [vmem:[%s4 + $0xc0] sm:$0xf] %vm1764, %v1684
  %1814 = vst.msk [vmem:[%s4 + $0xc4] sm:$0xf] %vm1764, %v1685
  %1815 = vst.msk [vmem:[%s4 + $0xc8] sm:$0xf] %vm1764, %v1686
  %1816 = vst.msk [vmem:[%s4 + $0xcc] sm:$0xf] %vm1764, %v1687
  %1817 = vst.msk [vmem:[%s4 + $0xd0] sm:$0xf] %vm1764, %v1688
  %1818 = vst.msk [vmem:[%s4 + $0xd4] sm:$0xf] %vm1764, %v1689
  %1819 = vst.msk [vmem:[%s4 + $0xd8] sm:$0xf] %vm1764, %v1690
  %1820 = vst.msk [vmem:[%s4 + $0xdc] sm:$0xf] %vm1764, %v1691
  %1821 = vst.msk [vmem:[%s4 + $0xe0] sm:$0xf] %vm1764, %v1692
  %1822 = vst.msk [vmem:[%s4 + $0xe4] sm:$0xf] %vm1764, %v1693
  %1823 = vst.msk [vmem:[%s4 + $0xe8] sm:$0xf] %vm1764, %v1694
  %1824 = vst.msk [vmem:[%s4 + $0xec] sm:$0xf] %vm1764, %v1695
  %1825 = vst.msk [vmem:[%s4 + $0xf0] sm:$0xf] %vm1764, %v1696
  %1826 = vst.msk [vmem:[%s4 + $0xf4] sm:$0xf] %vm1764, %v1697
  %1827 = vst.msk [vmem:[%s4 + $0xf8] sm:$0xf] %vm1764, %v1698
  %1828 = vst.msk [vmem:[%s4 + $0xfc] sm:$0xf] %vm1764, %v1699
  // Predicated region
  $region18: #{_stem_forward.1} parent=0 // pred_check
    _
  $region19: #{_stem_forward.1} parent=0 // pred_check_branch
    %1830 = sbr.rel (0) target = $region21
  $region20: #{_stem_forward.1} parent=0 // pred_region
    _
  $region21: #{_stem_forward.1} parent=0 // pred_fallthru
    _
  // Predicated region
  $region22: #{_stem_forward.1} parent=0 // pred_check
    _
  $region23: #{_stem_forward.1} parent=0 // pred_check_branch
    %1832 = sbr.rel (0) target = $region25
  $region24: #{_stem_forward.1} parent=0 // pred_region
    _
  $region25: #{_stem_forward.1} parent=0 // pred_fallthru
    _

</llo_original>
